<compile_context>
chip_gen: v6e
topology: v6e:2x2x1
jax: 0.10.0
libtpu: 0.0.40
codegen_flags: <defaults>
</compile_context>

<pallas_src>
import functools
import math

import jax
import jax.numpy as jnp
from jax.experimental import pallas as pl
from jax.experimental.pallas import tpu as pltpu

EPS = 1e-7          # eps[torch.float32]
MIN_NORM = 1e-5
MIN_NORM_SQ = MIN_NORM * MIN_NORM
MAX_NORM = 1e6


def _rcp(x):
    # Approximate EUP reciprocal (documented deviation: ~1e-3..1e-4 rel. error).
    return pl.reciprocal(x, approx=True)


# ------------- hyperbolic helpers, transposed (D, N) layout ------------------
# `is0` is the hoisted "time coordinate" (row 0) mask.  All feature reductions
# are sublane (axis=0) reduces; divides are rsqrt / reciprocal multiplies.

def _cosh_sinh(theta):
    # one exp + one reciprocal instead of four exps
    # NOTE: 0.5*(e - 1/e) loses precision for tiny theta and overflows for
    # theta >~ 88; both are guarded by the MIN/MAX norm clamps in practice.
    e = jnp.exp(theta)
    einv = 1.0 / e
    return 0.5 * (e + einv), 0.5 * (e - einv)


def _arcosh(z):
    return jnp.log(z + jnp.sqrt(z * z - 1.0))


def _proj(x, K, is0):
    y = jnp.where(is0, 0.0, x)
    y_sqnorm = jnp.sum(y * y, axis=0, keepdims=True)
    first = jnp.sqrt(jnp.maximum(K + y_sqnorm, EPS))
    return jnp.where(is0, first, x)


def _expmap0(u, K, sqrtK, is0):
    xr = jnp.where(is0, 0.0, u)
    ss = jnp.maximum(jnp.sum(xr * xr, axis=0, keepdims=True), MIN_NORM_SQ)
    inv_xn = jax.lax.rsqrt(ss)                  # 1 / max(||xr||, MIN_NORM)
    xn = ss * inv_xn                            # max(||xr||, MIN_NORM)
    theta = xn / sqrtK
    ch, sh = _cosh_sinh(theta)
    res = jnp.where(is0, sqrtK * ch, (sqrtK * sh) * (xr * inv_xn))
    return _proj(res, K, is0)


def _logmap0(x, K, sqrtK, is0):
    y = jnp.where(is0, 0.0, x)
    ss = jnp.maximum(jnp.sum(y * y, axis=0, keepdims=True), MIN_NORM_SQ)
    inv_yn = jax.lax.rsqrt(ss)
    theta = jnp.maximum(x[0:1, :] / sqrtK, 1.0 + EPS)
    return jnp.where(is0, 0.0, (sqrtK * _arcosh(theta)) * (y * inv_yn))


def _expmap(u, x, K, sqrtK, is0):
    u0 = u[0:1, :]
    mdot = jnp.sum(u * u, axis=0, keepdims=True) - 2.0 * u0 * u0   # minkowski dot
    normu = jnp.minimum(jnp.sqrt(jnp.maximum(mdot, EPS)), MAX_NORM)
    theta = jnp.maximum(normu / sqrtK, MIN_NORM)
    ch, sh = _cosh_sinh(theta)
    result = ch * x + (sh * _rcp(theta)) * u
    return _proj(result, K, is0)


def _proj_tan(u, x, is0):
    ux = jnp.sum(jnp.where(is0, 0.0, x) * jnp.where(is0, 0.0, u),
                 axis=0, keepdims=True)
    v0 = ux * _rcp(jnp.maximum(x[0:1, :], EPS))
    return jnp.where(is0, v0, u)


def _ptransp0(x, u, sqrtK, is0):
    # u is the (D, 1) bias tangent; its time row is exactly 0 by construction.
    x0 = x[0:1, :]
    y = jnp.where(is0, 0.0, x)
    ss = jnp.maximum(jnp.sum(y * y, axis=0, keepdims=True), MIN_NORM_SQ)
    inv_yn = jax.lax.rsqrt(ss)
    yn = ss * inv_yn
    y_n = y * inv_yn
    v = jnp.where(is0, -yn, (sqrtK - x0) * y_n)
    alpha = jnp.sum(y_n * u, axis=0, keepdims=True) / sqrtK
    r = u - alpha * v
    return _proj_tan(r, x, is0)


# -------------------------------- fused kernel --------------------------------

def _fused_kernel(kvals_ref,      # (L+1,) SMEM : K = 1 / softplus(curvature)
                  skvals_ref,     # (L+1,) SMEM : sqrt(K)
                  x0_ref,         # (D, N) encoder input, time row already 0
                  w_t_ref,        # (L, D, D) = weight.T per layer
                  wl_ref,         # (L, D, D) = lin.weight per layer
                  ub_ref,         # (L, D, 1) precomputed bias tangent per layer
                  adj_ref,        # (N, N) int8, adj[j, i] = 1 iff edge j -> i (+ self loops)
                  o_ref,          # (D, N) final output
                  *, num_layers):
    D, N = o_ref.shape

    # hoisted once: time-row mask and bf16 adjacency (exact for {0,1})
    is0 = jax.lax.broadcasted_iota(jnp.int32, (D, N), 0) == 0
    adj_bf = adj_ref[...].astype(jnp.bfloat16)

    # ---------------- encoder -------------------------------------------------
    K0 = kvals_ref[0]
    sK0 = skvals_ref[0]
    x_tan0 = jnp.where(is0, 0.0, x0_ref[...])                    # proj_tan0
    h = _proj(_expmap0(x_tan0, K0, sK0, is0), K0, is0)

    # TODO(synk): training-mode dropout on `weight` not implemented (eval mode => identity).
    # TODO(synk): for graphs where the (N, N) int8 adjacency no longer fits VMEM
    # (v7x ~64 MiB/TC), stream target-column tiles of `adj` via a "parallel"
    # grid axis so both v7x TensorCores split the aggregation.
    def layer(l, h):
        K_in = kvals_ref[l]
        sK_in = skvals_ref[l]
        K_out = kvals_ref[l + 1]
        sK_out = skvals_ref[l + 1]
        w_t = w_t_ref[l]                                          # (D, D) = weight.T
        wl = wl_ref[l]                                            # (D, D) = lin.weight
        ub = ub_ref[l]                                            # (D, 1) bias tangent

        # mobius_matvec(weight, h) + proj
        u = _logmap0(h, K_in, sK_in, is0)
        mu = jnp.dot(w_t, u, preferred_element_type=jnp.float32)
        res = _proj(_expmap0(mu, K_in, sK_in, is0), K_in, is0)

        # mobius_add of the (precomputed) hyperbolic-bias tangent
        v = _ptransp0(res, ub, sK_in, is0)
        res = _proj(_expmap(v, res, K_in, sK_in, is0), K_in, is0)

        # tangent-space linear
        x_tan = _logmap0(res, K_in, sK_in, is0)
        x_lin = jnp.dot(wl, x_tan, preferred_element_type=jnp.float32)   # (D, N)

        # Segment softmax over sources: the per-target term alpha_i is constant
        # within each segment and cancels exactly -> only per-source logits matter.
        s = jnp.sum(x_lin, axis=0, keepdims=True)                 # (1, N) alpha_j
        ecol = jnp.exp(s - jnp.max(s, axis=1, keepdims=True))     # global shift; exponents <= 0

        # Fold the softmax numerator & denominator into ONE MXU matmul against
        # the bf16 adjacency: rows 0..D-1 -> numerator, row D -> denominator.
        y = jnp.concatenate([x_lin * ecol, ecol], axis=0)         # (D+1, N)
        z = jnp.dot(y.astype(jnp.bfloat16), adj_bf,
                    preferred_element_type=jnp.float32)           # (D+1, N)
        den = jnp.maximum(z[D:D + 1, :], 1e-30)                   # self loops keep it > 0
        agg = z[:D, :] * _rcp(den)                                # weighted scatter-add

        out = _proj(_expmap(res, agg, K_in, sK_in, is0), K_in, is0)
        out = jnp.maximum(_logmap0(out, K_in, sK_in, is0), 0.0)   # relu
        out = jnp.where(is0, 0.0, out)                            # proj_tan0
        return _proj(_expmap0(out, K_out, sK_out, is0), K_out, is0)

    h = jax.lax.fori_loop(0, num_layers, layer, h)

    # ---------------- decoder -------------------------------------------------
    K_L = kvals_ref[num_layers]
    sK_L = skvals_ref[num_layers]
    o_ref[...] = jnp.where(is0, 0.0, _logmap0(h, K_L, sK_L, is0))


# --------------- host-side row-layout helpers (bias precompute only) ----------

def _proj_row(x, K):
    y = x[:, 1:]
    first = jnp.sqrt(jnp.maximum(K + jnp.sum(y * y, axis=-1, keepdims=True), EPS))
    return jnp.concatenate([first, y], axis=-1)


def _expmap0_row(u, K, sqrtK):
    x = u[:, 1:]
    xn = jnp.maximum(jnp.sqrt(jnp.sum(x * x, axis=-1, keepdims=True)), MIN_NORM)
    theta = xn / sqrtK
    res = jnp.concatenate([sqrtK * jnp.cosh(theta),
                           sqrtK * jnp.sinh(theta) * x / xn], axis=-1)
    return _proj_row(res, K)


def _logmap0_row(x, K, sqrtK):
    y = x[:, 1:]
    yn = jnp.maximum(jnp.sqrt(jnp.sum(y * y, axis=-1, keepdims=True)), MIN_NORM)
    theta = jnp.maximum(x[:, 0:1] / sqrtK, 1.0 + EPS)
    rest = sqrtK * jnp.arccosh(theta) * y / yn
    return jnp.concatenate([jnp.zeros_like(x[:, 0:1]), rest], axis=-1)


# ------------------------------ model wrapper ---------------------------------

class HyperbolicGCNPallas:
    """Pallas TPU port of hyperbolicGCN (forward pass, eval mode)."""

    def __init__(self, num_layers, in_channels, out_channels, curvature=0.1, key=None):
        assert num_layers >= 1
        assert in_channels == out_channels, (
            "reference module is only shape-consistent for in_channels == out_channels")
        self.num_layers = num_layers
        self.dim = out_channels
        D = self.dim
        c = math.log1p(math.exp(curvature))                 # F.softplus(curvature)
        self.curvatures = [c] * (num_layers + 1)

        key = jax.random.PRNGKey(0) if key is None else key
        keys = jax.random.split(key, 2 * num_layers)
        weights, lin_weights, biases = [], [], []
        for i in range(num_layers):
            bound_w = math.sqrt(2.0) * math.sqrt(6.0 / (D + D))   # xavier_uniform_, gain=sqrt(2)
            w = jax.random.uniform(keys[2 * i], (D, D), jnp.float32, -bound_w, bound_w)
            bound_l = math.sqrt(6.0 / (D + D))                    # glorot for self.lin
            wl = jax.random.uniform(keys[2 * i + 1], (D, D), jnp.float32, -bound_l, bound_l)
            weights.append(w)
            lin_weights.append(wl)
            biases.append(jnp.zeros((1, D), jnp.float32))         # init.constant_(bias, 0)

        # stacked per-layer parameters, kept resident in VMEM (a few KB total)
        self.w_t = jnp.stack([w.T for w in weights])              # (L, D, D): mobius weight, transposed
        self.wl = jnp.stack(lin_weights)                          # (L, D, D): lin.weight (out, in)

        # Hyperbolic-bias path precomputed per layer (depends only on bias & c_in):
        #   ub = logmap0(proj(expmap0(proj_tan0(bias)))), time component == 0.
        ubs = []
        for i in range(num_layers):
            K = 1.0 / self.curvatures[i]
            sqrtK = math.sqrt(K)
            b = biases[i]
            b_tan = jnp.concatenate([jnp.zeros((1, 1), jnp.float32), b[:, 1:]], axis=-1)
            hyp_bias = _proj_row(_expmap0_row(b_tan, K, sqrtK), K)
            ub = _logmap0_row(hyp_bias, K, sqrtK)                 # (1, D), column 0 exactly 0
            ubs.append(ub.T)                                      # (D, 1)
        self.ub = jnp.stack(ubs)                                  # (L, D, 1)

        # per-level curvature constants, read from SMEM
        self.kvals = jnp.asarray([1.0 / cc for cc in self.curvatures], jnp.float32)
        self.skvals = jnp.sqrt(self.kvals)

    @staticmethod
    def _adjacency_t(edge_index, num_nodes, num_padded):
        # int8 adjacency, source-major: adj_t[src, dst] = 1 (edge src -> dst);
        # remove_self_loops + add_self_loops -> diagonal forced to 1.  Padded
        # nodes only get a self loop, so they never contribute to real targets.
        src, dst = edge_index[0], edge_index[1]
        adj_t = jnp.zeros((num_padded, num_padded), jnp.int8).at[src, dst].set(1)
        return jnp.maximum(adj_t, jnp.eye(num_padded, dtype=jnp.int8))

    def __call__(self, x, edge_index):
        N = x.shape[0]
        D = self.dim
        L = self.num_layers
        assert x.shape[1] + 1 == D

        # pad nodes to a lane-dense multiple of 128 (padded features = 0)
        Npad = max(128, ((N + 127) // 128) * 128)
        xh_t = jnp.zeros((D, Npad), jnp.float32).at[1:, :N].set(
            x.astype(jnp.float32).T)                              # zero "time" row prepended
        adj_t = self._adjacency_t(edge_index, N, Npad)

        # VMEM budget: int8 adjacency + its bf16 cast + a handful of (D, N) slabs
        resident_bytes = (3 * Npad * Npad
                          + 24 * (D + 1) * Npad
                          + L * (2 * D * D + D) * 4)
        vmem_limit = int(min(100 * 1024 * 1024,
                             max(32 * 1024 * 1024, 2 * resident_bytes)))

        cost = pl.CostEstimate(
            flops=int(L * (2 * (D + 1) * Npad * Npad + 4 * D * D * Npad + 80 * D * Npad)),
            transcendentals=int((L + 1) * 24 * Npad),
            bytes_accessed=int(Npad * Npad + 8 * D * Npad
                               + L * (8 * D * D + 4 * D) + 8 * (L + 1)),
        )

        kernel = functools.partial(_fused_kernel, num_layers=L)
        out_t = pl.pallas_call(
            kernel,
            out_shape=jax.ShapeDtypeStruct((D, Npad), jnp.float32),
            # No grid: one invocation, lax.fori_loop over layers inside the
            # kernel => every resident array is single-buffered in VMEM.
            in_specs=[
                pl.BlockSpec(memory_space=pltpu.MemorySpace.SMEM),   # K per level
                pl.BlockSpec(memory_space=pltpu.MemorySpace.SMEM),   # sqrt(K) per level
                pl.BlockSpec(memory_space=pltpu.MemorySpace.VMEM),   # encoder input (D, Npad)
                pl.BlockSpec(memory_space=pltpu.MemorySpace.VMEM),   # weight.T     (L, D, D)
                pl.BlockSpec(memory_space=pltpu.MemorySpace.VMEM),   # lin.weight   (L, D, D)
                pl.BlockSpec(memory_space=pltpu.MemorySpace.VMEM),   # bias tangent (L, D, 1)
                pl.BlockSpec(memory_space=pltpu.MemorySpace.VMEM),   # int8 adjacency (Npad, Npad)
            ],
            out_specs=pl.BlockSpec(memory_space=pltpu.MemorySpace.VMEM),
            compiler_params=pltpu.CompilerParams(vmem_limit_bytes=vmem_limit),
            cost_estimate=cost,
        )(self.kvals, self.skvals, xh_t, self.w_t, self.wl, self.ub, adj_t)

        return out_t[:, :N].T                                     # back to (N, D) row layout


if __name__ == "__main__":
    key = jax.random.PRNGKey(0)
    kx, kp = jax.random.split(key)

    num_layers, channels, N = 2, 8, 16          # hidden dim D = 8, raw features = 7
    x = jax.random.normal(kx, (N, channels - 1), jnp.float32)

    # deterministic bidirectional ring graph (PyG convention: row 0 = source, row 1 = target)
    idx = jnp.arange(N, dtype=jnp.int32)
    src = jnp.concatenate([idx, (idx + 1) % N])
    dst = jnp.concatenate([(idx + 1) % N, idx])
    edge_index = jnp.stack([src, dst])          # (2, 32)

    model = HyperbolicGCNPallas(num_layers, channels, channels, curvature=0.1, key=kp)
    out = model(x, edge_index)
    jax.block_until_ready(out)
    assert out.shape == (N, channels)
    assert bool(jnp.all(jnp.isfinite(out)))
    print("KERNEL_OK")
</pallas_src>

<mosaic_0001>
module attributes {stable_mosaic.version = 11 : i64} {
  func.func @_fused_kernel(%arg0: memref<3xf32, #tpu.memory_space<smem>>, %arg1: memref<3xf32, #tpu.memory_space<smem>>, %arg2: memref<8x128xf32, #tpu.memory_space<vmem>>, %arg3: memref<2x8x8xf32, #tpu.memory_space<vmem>>, %arg4: memref<2x8x8xf32, #tpu.memory_space<vmem>>, %arg5: memref<2x8x1xf32, #tpu.memory_space<vmem>>, %arg6: memref<128x128xi8, #tpu.memory_space<vmem>>, %arg7: memref<8x128xf32, #tpu.memory_space<vmem>>) attributes {dimension_semantics = [], scalar_prefetch = 0 : i64, scratch_operands = 0 : i64, tpu.core_type = #tpu.core_type<tc>} {
    %0 = tpu.iota {dimensions = array<i32: 0>} : vector<8x128xi32>
    %c0_i32 = arith.constant 0 : i32
    %1 = vector.broadcast %c0_i32 : i32 to vector<8x128xi32>
    %2 = arith.cmpi eq, %0, %1 : vector<8x128xi32>
    %c0 = arith.constant 0 : index
    %c0_0 = arith.constant 0 : index
    %3 = vector.load %arg6[%c0, %c0_0] : memref<128x128xi8, #tpu.memory_space<vmem>>, vector<128x128xi8>
    %4 = arith.sitofp %3 : vector<128x128xi8> to vector<128x128xbf16>
    %c0_1 = arith.constant 0 : index
    %5 = memref.load %arg0[%c0_1] : memref<3xf32, #tpu.memory_space<smem>>
    %c0_2 = arith.constant 0 : index
    %6 = memref.load %arg1[%c0_2] : memref<3xf32, #tpu.memory_space<smem>>
    %c0_3 = arith.constant 0 : index
    %c0_4 = arith.constant 0 : index
    %7 = vector.load %arg2[%c0_3, %c0_4] : memref<8x128xf32, #tpu.memory_space<vmem>>, vector<8x128xf32>
    %cst = arith.constant 0.000000e+00 : f32
    %8 = vector.broadcast %cst : f32 to vector<8x128xf32>
    %9 = arith.select %2, %8, %7 : vector<8x128xi1>, vector<8x128xf32>
    %cst_5 = arith.constant 0.000000e+00 : f32
    %10 = vector.broadcast %cst_5 : f32 to vector<8x128xf32>
    %11 = arith.select %2, %10, %9 : vector<8x128xi1>, vector<8x128xf32>
    %12 = arith.mulf %11, %11 : vector<8x128xf32>
    %cst_6 = arith.constant dense<0.000000e+00> : vector<128xf32>
    %13 = vector.multi_reduction <add>, %12, %cst_6 [0] : vector<8x128xf32> to vector<128xf32>
    %14 = vector.shape_cast %13 : vector<128xf32> to vector<1x128xf32>
    %cst_7 = arith.constant 1.000000e-10 : f32
    %15 = vector.broadcast %cst_7 : f32 to vector<1x128xf32>
    %16 = arith.maximumf %14, %15 : vector<1x128xf32>
    %17 = math.rsqrt %16 : vector<1x128xf32>
    %18 = arith.mulf %16, %17 : vector<1x128xf32>
    %19 = vector.broadcast %6 : f32 to vector<1x128xf32>
    %20 = arith.divf %18, %19 : vector<1x128xf32>
    %21 = math.exp %20 : vector<1x128xf32>
    %cst_8 = arith.constant 1.000000e+00 : f32
    %22 = vector.broadcast %cst_8 : f32 to vector<1x128xf32>
    %23 = arith.divf %22, %21 : vector<1x128xf32>
    %24 = arith.addf %21, %23 : vector<1x128xf32>
    %cst_9 = arith.constant 5.000000e-01 : f32
    %25 = vector.broadcast %cst_9 : f32 to vector<1x128xf32>
    %26 = arith.mulf %25, %24 : vector<1x128xf32>
    %27 = arith.subf %21, %23 : vector<1x128xf32>
    %cst_10 = arith.constant 5.000000e-01 : f32
    %28 = vector.broadcast %cst_10 : f32 to vector<1x128xf32>
    %29 = arith.mulf %28, %27 : vector<1x128xf32>
    %30 = vector.broadcast %6 : f32 to vector<1x128xf32>
    %31 = arith.mulf %30, %26 : vector<1x128xf32>
    %32 = vector.broadcast %6 : f32 to vector<1x128xf32>
    %33 = arith.mulf %32, %29 : vector<1x128xf32>
    %34 = vector.broadcast %17 : vector<1x128xf32> to vector<8x128xf32>
    %35 = arith.mulf %11, %34 : vector<8x128xf32>
    %36 = vector.broadcast %33 : vector<1x128xf32> to vector<8x128xf32>
    %37 = arith.mulf %36, %35 : vector<8x128xf32>
    %38 = vector.shape_cast %31 : vector<1x128xf32> to vector<1x128xf32>
    %39 = vector.broadcast %38 : vector<1x128xf32> to vector<8x128xf32>
    %40 = arith.select %2, %39, %37 : vector<8x128xi1>, vector<8x128xf32>
    %cst_11 = arith.constant 0.000000e+00 : f32
    %41 = vector.broadcast %cst_11 : f32 to vector<8x128xf32>
    %42 = arith.select %2, %41, %40 : vector<8x128xi1>, vector<8x128xf32>
    %43 = arith.mulf %42, %42 : vector<8x128xf32>
    %cst_12 = arith.constant dense<0.000000e+00> : vector<128xf32>
    %44 = vector.multi_reduction <add>, %43, %cst_12 [0] : vector<8x128xf32> to vector<128xf32>
    %45 = vector.shape_cast %44 : vector<128xf32> to vector<1x128xf32>
    %46 = vector.broadcast %5 : f32 to vector<1x128xf32>
    %47 = arith.addf %46, %45 : vector<1x128xf32>
    %cst_13 = arith.constant 1.000000e-07 : f32
    %48 = vector.broadcast %cst_13 : f32 to vector<1x128xf32>
    %49 = arith.maximumf %47, %48 : vector<1x128xf32>
    %50 = math.sqrt %49 : vector<1x128xf32>
    %51 = vector.shape_cast %50 : vector<1x128xf32> to vector<1x128xf32>
    %52 = vector.broadcast %51 : vector<1x128xf32> to vector<8x128xf32>
    %53 = arith.select %2, %52, %40 : vector<8x128xi1>, vector<8x128xf32>
    %cst_14 = arith.constant 0.000000e+00 : f32
    %54 = vector.broadcast %cst_14 : f32 to vector<8x128xf32>
    %55 = arith.select %2, %54, %53 : vector<8x128xi1>, vector<8x128xf32>
    %56 = arith.mulf %55, %55 : vector<8x128xf32>
    %cst_15 = arith.constant dense<0.000000e+00> : vector<128xf32>
    %57 = vector.multi_reduction <add>, %56, %cst_15 [0] : vector<8x128xf32> to vector<128xf32>
    %58 = vector.shape_cast %57 : vector<128xf32> to vector<1x128xf32>
    %59 = vector.broadcast %5 : f32 to vector<1x128xf32>
    %60 = arith.addf %59, %58 : vector<1x128xf32>
    %cst_16 = arith.constant 1.000000e-07 : f32
    %61 = vector.broadcast %cst_16 : f32 to vector<1x128xf32>
    %62 = arith.maximumf %60, %61 : vector<1x128xf32>
    %63 = math.sqrt %62 : vector<1x128xf32>
    %64 = vector.shape_cast %63 : vector<1x128xf32> to vector<1x128xf32>
    %65 = vector.broadcast %64 : vector<1x128xf32> to vector<8x128xf32>
    %66 = arith.select %2, %65, %53 : vector<8x128xi1>, vector<8x128xf32>
    %c0_i32_17 = arith.constant 0 : i32
    %c2_i32 = arith.constant 2 : i32
    %67 = arith.addi %c0_i32_17, %c2_i32 : i32
    %c1_i32 = arith.constant 1 : i32
    %68 = scf.for %arg8 = %c0_i32_17 to %67 step %c1_i32 iter_args(%arg9 = %66) -> (vector<8x128xf32>)  : i32 {
      %100 = arith.index_cast %arg8 : i32 to index
      %101 = memref.load %arg0[%100] : memref<3xf32, #tpu.memory_space<smem>>
      %102 = arith.index_cast %arg8 : i32 to index
      %103 = memref.load %arg1[%102] : memref<3xf32, #tpu.memory_space<smem>>
      %c1_i32_28 = arith.constant 1 : i32
      %104 = arith.addi %arg8, %c1_i32_28 : i32
      %105 = arith.index_cast %104 : i32 to index
      %106 = memref.load %arg0[%105] : memref<3xf32, #tpu.memory_space<smem>>
      %c1_i32_29 = arith.constant 1 : i32
      %107 = arith.addi %arg8, %c1_i32_29 : i32
      %108 = arith.index_cast %107 : i32 to index
      %109 = memref.load %arg1[%108] : memref<3xf32, #tpu.memory_space<smem>>
      %110 = arith.index_cast %arg8 : i32 to index
      %c0_30 = arith.constant 0 : index
      %c0_31 = arith.constant 0 : index
      %111 = vector.load %arg3[%110, %c0_30, %c0_31] : memref<2x8x8xf32, #tpu.memory_space<vmem>>, vector<1x8x8xf32>
      %112 = vector.shape_cast %111 : vector<1x8x8xf32> to vector<8x8xf32>
      %113 = arith.index_cast %arg8 : i32 to index
      %c0_32 = arith.constant 0 : index
      %c0_33 = arith.constant 0 : index
      %114 = vector.load %arg4[%113, %c0_32, %c0_33] : memref<2x8x8xf32, #tpu.memory_space<vmem>>, vector<1x8x8xf32>
      %115 = vector.shape_cast %114 : vector<1x8x8xf32> to vector<8x8xf32>
      %116 = arith.index_cast %arg8 : i32 to index
      %c0_34 = arith.constant 0 : index
      %c0_35 = arith.constant 0 : index
      %117 = vector.load %arg5[%116, %c0_34, %c0_35] : memref<2x8x1xf32, #tpu.memory_space<vmem>>, vector<1x8x1xf32>
      %118 = vector.shape_cast %117 : vector<1x8x1xf32> to vector<8x1xf32>
      %cst_36 = arith.constant 0.000000e+00 : f32
      %119 = vector.broadcast %cst_36 : f32 to vector<8x128xf32>
      %120 = arith.select %2, %119, %arg9 : vector<8x128xi1>, vector<8x128xf32>
      %121 = arith.mulf %120, %120 : vector<8x128xf32>
      %cst_37 = arith.constant dense<0.000000e+00> : vector<128xf32>
      %122 = vector.multi_reduction <add>, %121, %cst_37 [0] : vector<8x128xf32> to vector<128xf32>
      %123 = vector.shape_cast %122 : vector<128xf32> to vector<1x128xf32>
      %cst_38 = arith.constant 1.000000e-10 : f32
      %124 = vector.broadcast %cst_38 : f32 to vector<1x128xf32>
      %125 = arith.maximumf %123, %124 : vector<1x128xf32>
      %126 = math.rsqrt %125 : vector<1x128xf32>
      %127 = vector.extract_strided_slice %arg9 {offsets = [0, 0], sizes = [1, 128], strides = [1, 1]} : vector<8x128xf32> to vector<1x128xf32>
      %128 = vector.broadcast %103 : f32 to vector<1x128xf32>
      %129 = arith.divf %127, %128 : vector<1x128xf32>
      %cst_39 = arith.constant 1.00000012 : f32
      %130 = vector.broadcast %cst_39 : f32 to vector<1x128xf32>
      %131 = arith.maximumf %129, %130 : vector<1x128xf32>
      %132 = arith.mulf %131, %131 : vector<1x128xf32>
      %cst_40 = arith.constant 1.000000e+00 : f32
      %133 = vector.broadcast %cst_40 : f32 to vector<1x128xf32>
      %134 = arith.subf %132, %133 : vector<1x128xf32>
      %135 = math.sqrt %134 : vector<1x128xf32>
      %136 = arith.addf %131, %135 : vector<1x128xf32>
      %137 = math.log %136 : vector<1x128xf32>
      %138 = vector.broadcast %103 : f32 to vector<1x128xf32>
      %139 = arith.mulf %138, %137 : vector<1x128xf32>
      %140 = vector.broadcast %126 : vector<1x128xf32> to vector<8x128xf32>
      %141 = arith.mulf %120, %140 : vector<8x128xf32>
      %142 = vector.broadcast %139 : vector<1x128xf32> to vector<8x128xf32>
      %143 = arith.mulf %142, %141 : vector<8x128xf32>
      %cst_41 = arith.constant 0.000000e+00 : f32
      %144 = vector.broadcast %cst_41 : f32 to vector<8x128xf32>
      %145 = arith.select %2, %144, %143 : vector<8x128xi1>, vector<8x128xf32>
      %cst_42 = arith.constant dense<0.000000e+00> : vector<8x128xf32>
      %146 = tpu.matmul %112, %145, %cst_42 {dimension_numbers = #tpu.dot_dimension_numbers<[1], [0], [0], [1], [0, 0, 1, 1], [], []>} : vector<8x8xf32>, vector<8x128xf32>, vector<8x128xf32> -> vector<8x128xf32>
      %cst_43 = arith.constant 0.000000e+00 : f32
      %147 = vector.broadcast %cst_43 : f32 to vector<8x128xf32>
      %148 = arith.select %2, %147, %146 : vector<8x128xi1>, vector<8x128xf32>
      %149 = arith.mulf %148, %148 : vector<8x128xf32>
      %cst_44 = arith.constant dense<0.000000e+00> : vector<128xf32>
      %150 = vector.multi_reduction <add>, %149, %cst_44 [0] : vector<8x128xf32> to vector<128xf32>
      %151 = vector.shape_cast %150 : vector<128xf32> to vector<1x128xf32>
      %cst_45 = arith.constant 1.000000e-10 : f32
      %152 = vector.broadcast %cst_45 : f32 to vector<1x128xf32>
      %153 = arith.maximumf %151, %152 : vector<1x128xf32>
      %154 = math.rsqrt %153 : vector<1x128xf32>
      %155 = arith.mulf %153, %154 : vector<1x128xf32>
      %156 = vector.broadcast %103 : f32 to vector<1x128xf32>
      %157 = arith.divf %155, %156 : vector<1x128xf32>
      %158 = math.exp %157 : vector<1x128xf32>
      %cst_46 = arith.constant 1.000000e+00 : f32
      %159 = vector.broadcast %cst_46 : f32 to vector<1x128xf32>
      %160 = arith.divf %159, %158 : vector<1x128xf32>
      %161 = arith.addf %158, %160 : vector<1x128xf32>
      %cst_47 = arith.constant 5.000000e-01 : f32
      %162 = vector.broadcast %cst_47 : f32 to vector<1x128xf32>
      %163 = arith.mulf %162, %161 : vector<1x128xf32>
      %164 = arith.subf %158, %160 : vector<1x128xf32>
      %cst_48 = arith.constant 5.000000e-01 : f32
      %165 = vector.broadcast %cst_48 : f32 to vector<1x128xf32>
      %166 = arith.mulf %165, %164 : vector<1x128xf32>
      %167 = vector.broadcast %103 : f32 to vector<1x128xf32>
      %168 = arith.mulf %167, %163 : vector<1x128xf32>
      %169 = vector.broadcast %103 : f32 to vector<1x128xf32>
      %170 = arith.mulf %169, %166 : vector<1x128xf32>
      %171 = vector.broadcast %154 : vector<1x128xf32> to vector<8x128xf32>
      %172 = arith.mulf %148, %171 : vector<8x128xf32>
      %173 = vector.broadcast %170 : vector<1x128xf32> to vector<8x128xf32>
      %174 = arith.mulf %173, %172 : vector<8x128xf32>
      %175 = vector.shape_cast %168 : vector<1x128xf32> to vector<1x128xf32>
      %176 = vector.broadcast %175 : vector<1x128xf32> to vector<8x128xf32>
      %177 = arith.select %2, %176, %174 : vector<8x128xi1>, vector<8x128xf32>
      %cst_49 = arith.constant 0.000000e+00 : f32
      %178 = vector.broadcast %cst_49 : f32 to vector<8x128xf32>
      %179 = arith.select %2, %178, %177 : vector<8x128xi1>, vector<8x128xf32>
      %180 = arith.mulf %179, %179 : vector<8x128xf32>
      %cst_50 = arith.constant dense<0.000000e+00> : vector<128xf32>
      %181 = vector.multi_reduction <add>, %180, %cst_50 [0] : vector<8x128xf32> to vector<128xf32>
      %182 = vector.shape_cast %181 : vector<128xf32> to vector<1x128xf32>
      %183 = vector.broadcast %101 : f32 to vector<1x128xf32>
      %184 = arith.addf %183, %182 : vector<1x128xf32>
      %cst_51 = arith.constant 1.000000e-07 : f32
      %185 = vector.broadcast %cst_51 : f32 to vector<1x128xf32>
      %186 = arith.maximumf %184, %185 : vector<1x128xf32>
      %187 = math.sqrt %186 : vector<1x128xf32>
      %188 = vector.shape_cast %187 : vector<1x128xf32> to vector<1x128xf32>
      %189 = vector.broadcast %188 : vector<1x128xf32> to vector<8x128xf32>
      %190 = arith.select %2, %189, %177 : vector<8x128xi1>, vector<8x128xf32>
      %cst_52 = arith.constant 0.000000e+00 : f32
      %191 = vector.broadcast %cst_52 : f32 to vector<8x128xf32>
      %192 = arith.select %2, %191, %190 : vector<8x128xi1>, vector<8x128xf32>
      %193 = arith.mulf %192, %192 : vector<8x128xf32>
      %cst_53 = arith.constant dense<0.000000e+00> : vector<128xf32>
      %194 = vector.multi_reduction <add>, %193, %cst_53 [0] : vector<8x128xf32> to vector<128xf32>
      %195 = vector.shape_cast %194 : vector<128xf32> to vector<1x128xf32>
      %196 = vector.broadcast %101 : f32 to vector<1x128xf32>
      %197 = arith.addf %196, %195 : vector<1x128xf32>
      %cst_54 = arith.constant 1.000000e-07 : f32
      %198 = vector.broadcast %cst_54 : f32 to vector<1x128xf32>
      %199 = arith.maximumf %197, %198 : vector<1x128xf32>
      %200 = math.sqrt %199 : vector<1x128xf32>
      %201 = vector.shape_cast %200 : vector<1x128xf32> to vector<1x128xf32>
      %202 = vector.broadcast %201 : vector<1x128xf32> to vector<8x128xf32>
      %203 = arith.select %2, %202, %190 : vector<8x128xi1>, vector<8x128xf32>
      %204 = vector.extract_strided_slice %203 {offsets = [0, 0], sizes = [1, 128], strides = [1, 1]} : vector<8x128xf32> to vector<1x128xf32>
      %cst_55 = arith.constant 0.000000e+00 : f32
      %205 = vector.broadcast %cst_55 : f32 to vector<8x128xf32>
      %206 = arith.select %2, %205, %203 : vector<8x128xi1>, vector<8x128xf32>
      %207 = arith.mulf %206, %206 : vector<8x128xf32>
      %cst_56 = arith.constant dense<0.000000e+00> : vector<128xf32>
      %208 = vector.multi_reduction <add>, %207, %cst_56 [0] : vector<8x128xf32> to vector<128xf32>
      %209 = vector.shape_cast %208 : vector<128xf32> to vector<1x128xf32>
      %cst_57 = arith.constant 1.000000e-10 : f32
      %210 = vector.broadcast %cst_57 : f32 to vector<1x128xf32>
      %211 = arith.maximumf %209, %210 : vector<1x128xf32>
      %212 = math.rsqrt %211 : vector<1x128xf32>
      %213 = arith.mulf %211, %212 : vector<1x128xf32>
      %214 = vector.broadcast %212 : vector<1x128xf32> to vector<8x128xf32>
      %215 = arith.mulf %206, %214 : vector<8x128xf32>
      %cst_58 = arith.constant 0.000000e+00 : f32
      %216 = vector.broadcast %cst_58 : f32 to vector<1x128xf32>
      %217 = arith.subf %216, %213 : vector<1x128xf32>
      %218 = vector.broadcast %103 : f32 to vector<1x128xf32>
      %219 = arith.subf %218, %204 : vector<1x128xf32>
      %220 = vector.broadcast %219 : vector<1x128xf32> to vector<8x128xf32>
      %221 = arith.mulf %220, %215 : vector<8x128xf32>
      %222 = vector.shape_cast %217 : vector<1x128xf32> to vector<1x128xf32>
      %223 = vector.broadcast %222 : vector<1x128xf32> to vector<8x128xf32>
      %224 = arith.select %2, %223, %221 : vector<8x128xi1>, vector<8x128xf32>
      %225 = vector.broadcast %118 : vector<8x1xf32> to vector<8x128xf32>
      %226 = arith.mulf %215, %225 : vector<8x128xf32>
      %cst_59 = arith.constant dense<0.000000e+00> : vector<128xf32>
      %227 = vector.multi_reduction <add>, %226, %cst_59 [0] : vector<8x128xf32> to vector<128xf32>
      %228 = vector.shape_cast %227 : vector<128xf32> to vector<1x128xf32>
      %229 = vector.broadcast %103 : f32 to vector<1x128xf32>
      %230 = arith.divf %228, %229 : vector<1x128xf32>
      %231 = vector.broadcast %230 : vector<1x128xf32> to vector<8x128xf32>
      %232 = arith.mulf %231, %224 : vector<8x128xf32>
      %233 = vector.broadcast %118 : vector<8x1xf32> to vector<8x128xf32>
      %234 = arith.subf %233, %232 : vector<8x128xf32>
      %cst_60 = arith.constant 0.000000e+00 : f32
      %235 = vector.broadcast %cst_60 : f32 to vector<8x128xf32>
      %236 = arith.select %2, %235, %203 : vector<8x128xi1>, vector<8x128xf32>
      %cst_61 = arith.constant 0.000000e+00 : f32
      %237 = vector.broadcast %cst_61 : f32 to vector<8x128xf32>
      %238 = arith.select %2, %237, %234 : vector<8x128xi1>, vector<8x128xf32>
      %239 = arith.mulf %236, %238 : vector<8x128xf32>
      %cst_62 = arith.constant dense<0.000000e+00> : vector<128xf32>
      %240 = vector.multi_reduction <add>, %239, %cst_62 [0] : vector<8x128xf32> to vector<128xf32>
      %241 = vector.shape_cast %240 : vector<128xf32> to vector<1x128xf32>
      %242 = vector.extract_strided_slice %203 {offsets = [0, 0], sizes = [1, 128], strides = [1, 1]} : vector<8x128xf32> to vector<1x128xf32>
      %cst_63 = arith.constant 1.000000e-07 : f32
      %243 = vector.broadcast %cst_63 : f32 to vector<1x128xf32>
      %244 = arith.maximumf %242, %243 : vector<1x128xf32>
      %245 = tpu.reciprocal %244 {approx = true} : vector<1x128xf32> -> vector<1x128xf32>
      %246 = arith.mulf %241, %245 : vector<1x128xf32>
      %247 = vector.shape_cast %246 : vector<1x128xf32> to vector<1x128xf32>
      %248 = vector.broadcast %247 : vector<1x128xf32> to vector<8x128xf32>
      %249 = arith.select %2, %248, %234 : vector<8x128xi1>, vector<8x128xf32>
      %250 = vector.extract_strided_slice %249 {offsets = [0, 0], sizes = [1, 128], strides = [1, 1]} : vector<8x128xf32> to vector<1x128xf32>
      %251 = arith.mulf %249, %249 : vector<8x128xf32>
      %cst_64 = arith.constant dense<0.000000e+00> : vector<128xf32>
      %252 = vector.multi_reduction <add>, %251, %cst_64 [0] : vector<8x128xf32> to vector<128xf32>
      %253 = vector.shape_cast %252 : vector<128xf32> to vector<1x128xf32>
      %cst_65 = arith.constant 2.000000e+00 : f32
      %254 = vector.broadcast %cst_65 : f32 to vector<1x128xf32>
      %255 = arith.mulf %254, %250 : vector<1x128xf32>
      %256 = arith.mulf %255, %250 : vector<1x128xf32>
      %257 = arith.subf %253, %256 : vector<1x128xf32>
      %cst_66 = arith.constant 1.000000e-07 : f32
      %258 = vector.broadcast %cst_66 : f32 to vector<1x128xf32>
      %259 = arith.maximumf %257, %258 : vector<1x128xf32>
      %260 = math.sqrt %259 : vector<1x128xf32>
      %cst_67 = arith.constant 1.000000e+06 : f32
      %261 = vector.broadcast %cst_67 : f32 to vector<1x128xf32>
      %262 = arith.minimumf %260, %261 : vector<1x128xf32>
      %263 = vector.broadcast %103 : f32 to vector<1x128xf32>
      %264 = arith.divf %262, %263 : vector<1x128xf32>
      %cst_68 = arith.constant 9.99999974E-6 : f32
      %265 = vector.broadcast %cst_68 : f32 to vector<1x128xf32>
      %266 = arith.maximumf %264, %265 : vector<1x128xf32>
      %267 = math.exp %266 : vector<1x128xf32>
      %cst_69 = arith.constant 1.000000e+00 : f32
      %268 = vector.broadcast %cst_69 : f32 to vector<1x128xf32>
      %269 = arith.divf %268, %267 : vector<1x128xf32>
      %270 = arith.addf %267, %269 : vector<1x128xf32>
      %cst_70 = arith.constant 5.000000e-01 : f32
      %271 = vector.broadcast %cst_70 : f32 to vector<1x128xf32>
      %272 = arith.mulf %271, %270 : vector<1x128xf32>
      %273 = arith.subf %267, %269 : vector<1x128xf32>
      %cst_71 = arith.constant 5.000000e-01 : f32
      %274 = vector.broadcast %cst_71 : f32 to vector<1x128xf32>
      %275 = arith.mulf %274, %273 : vector<1x128xf32>
      %276 = vector.broadcast %272 : vector<1x128xf32> to vector<8x128xf32>
      %277 = arith.mulf %276, %203 : vector<8x128xf32>
      %278 = tpu.reciprocal %266 {approx = true} : vector<1x128xf32> -> vector<1x128xf32>
      %279 = arith.mulf %275, %278 : vector<1x128xf32>
      %280 = vector.broadcast %279 : vector<1x128xf32> to vector<8x128xf32>
      %281 = arith.mulf %280, %249 : vector<8x128xf32>
      %282 = arith.addf %277, %281 : vector<8x128xf32>
      %cst_72 = arith.constant 0.000000e+00 : f32
      %283 = vector.broadcast %cst_72 : f32 to vector<8x128xf32>
      %284 = arith.select %2, %283, %282 : vector<8x128xi1>, vector<8x128xf32>
      %285 = arith.mulf %284, %284 : vector<8x128xf32>
      %cst_73 = arith.constant dense<0.000000e+00> : vector<128xf32>
      %286 = vector.multi_reduction <add>, %285, %cst_73 [0] : vector<8x128xf32> to vector<128xf32>
      %287 = vector.shape_cast %286 : vector<128xf32> to vector<1x128xf32>
      %288 = vector.broadcast %101 : f32 to vector<1x128xf32>
      %289 = arith.addf %288, %287 : vector<1x128xf32>
      %cst_74 = arith.constant 1.000000e-07 : f32
      %290 = vector.broadcast %cst_74 : f32 to vector<1x128xf32>
      %291 = arith.maximumf %289, %290 : vector<1x128xf32>
      %292 = math.sqrt %291 : vector<1x128xf32>
      %293 = vector.shape_cast %292 : vector<1x128xf32> to vector<1x128xf32>
      %294 = vector.broadcast %293 : vector<1x128xf32> to vector<8x128xf32>
      %295 = arith.select %2, %294, %282 : vector<8x128xi1>, vector<8x128xf32>
      %cst_75 = arith.constant 0.000000e+00 : f32
      %296 = vector.broadcast %cst_75 : f32 to vector<8x128xf32>
      %297 = arith.select %2, %296, %295 : vector<8x128xi1>, vector<8x128xf32>
      %298 = arith.mulf %297, %297 : vector<8x128xf32>
      %cst_76 = arith.constant dense<0.000000e+00> : vector<128xf32>
      %299 = vector.multi_reduction <add>, %298, %cst_76 [0] : vector<8x128xf32> to vector<128xf32>
      %300 = vector.shape_cast %299 : vector<128xf32> to vector<1x128xf32>
      %301 = vector.broadcast %101 : f32 to vector<1x128xf32>
      %302 = arith.addf %301, %300 : vector<1x128xf32>
      %cst_77 = arith.constant 1.000000e-07 : f32
      %303 = vector.broadcast %cst_77 : f32 to vector<1x128xf32>
      %304 = arith.maximumf %302, %303 : vector<1x128xf32>
      %305 = math.sqrt %304 : vector<1x128xf32>
      %306 = vector.shape_cast %305 : vector<1x128xf32> to vector<1x128xf32>
      %307 = vector.broadcast %306 : vector<1x128xf32> to vector<8x128xf32>
      %308 = arith.select %2, %307, %295 : vector<8x128xi1>, vector<8x128xf32>
      %cst_78 = arith.constant 0.000000e+00 : f32
      %309 = vector.broadcast %cst_78 : f32 to vector<8x128xf32>
      %310 = arith.select %2, %309, %308 : vector<8x128xi1>, vector<8x128xf32>
      %311 = arith.mulf %310, %310 : vector<8x128xf32>
      %cst_79 = arith.constant dense<0.000000e+00> : vector<128xf32>
      %312 = vector.multi_reduction <add>, %311, %cst_79 [0] : vector<8x128xf32> to vector<128xf32>
      %313 = vector.shape_cast %312 : vector<128xf32> to vector<1x128xf32>
      %cst_80 = arith.constant 1.000000e-10 : f32
      %314 = vector.broadcast %cst_80 : f32 to vector<1x128xf32>
      %315 = arith.maximumf %313, %314 : vector<1x128xf32>
      %316 = math.rsqrt %315 : vector<1x128xf32>
      %317 = vector.extract_strided_slice %308 {offsets = [0, 0], sizes = [1, 128], strides = [1, 1]} : vector<8x128xf32> to vector<1x128xf32>
      %318 = vector.broadcast %103 : f32 to vector<1x128xf32>
      %319 = arith.divf %317, %318 : vector<1x128xf32>
      %cst_81 = arith.constant 1.00000012 : f32
      %320 = vector.broadcast %cst_81 : f32 to vector<1x128xf32>
      %321 = arith.maximumf %319, %320 : vector<1x128xf32>
      %322 = arith.mulf %321, %321 : vector<1x128xf32>
      %cst_82 = arith.constant 1.000000e+00 : f32
      %323 = vector.broadcast %cst_82 : f32 to vector<1x128xf32>
      %324 = arith.subf %322, %323 : vector<1x128xf32>
      %325 = math.sqrt %324 : vector<1x128xf32>
      %326 = arith.addf %321, %325 : vector<1x128xf32>
      %327 = math.log %326 : vector<1x128xf32>
      %328 = vector.broadcast %103 : f32 to vector<1x128xf32>
      %329 = arith.mulf %328, %327 : vector<1x128xf32>
      %330 = vector.broadcast %316 : vector<1x128xf32> to vector<8x128xf32>
      %331 = arith.mulf %310, %330 : vector<8x128xf32>
      %332 = vector.broadcast %329 : vector<1x128xf32> to vector<8x128xf32>
      %333 = arith.mulf %332, %331 : vector<8x128xf32>
      %cst_83 = arith.constant 0.000000e+00 : f32
      %334 = vector.broadcast %cst_83 : f32 to vector<8x128xf32>
      %335 = arith.select %2, %334, %333 : vector<8x128xi1>, vector<8x128xf32>
      %cst_84 = arith.constant dense<0.000000e+00> : vector<8x128xf32>
      %336 = tpu.matmul %115, %335, %cst_84 {dimension_numbers = #tpu.dot_dimension_numbers<[1], [0], [0], [1], [0, 0, 1, 1], [], []>} : vector<8x8xf32>, vector<8x128xf32>, vector<8x128xf32> -> vector<8x128xf32>
      %cst_85 = arith.constant dense<0.000000e+00> : vector<128xf32>
      %337 = vector.multi_reduction <add>, %336, %cst_85 [0] : vector<8x128xf32> to vector<128xf32>
      %338 = vector.shape_cast %337 : vector<128xf32> to vector<1x128xf32>
      %cst_86 = arith.constant dense<0xFF800000> : vector<1xf32>
      %339 = vector.multi_reduction <maximumf>, %338, %cst_86 [1] : vector<1x128xf32> to vector<1xf32>
      %340 = vector.shape_cast %339 : vector<1xf32> to vector<1x1xf32>
      %341 = vector.broadcast %340 : vector<1x1xf32> to vector<1x128xf32>
      %342 = arith.subf %338, %341 : vector<1x128xf32>
      %343 = math.exp %342 : vector<1x128xf32>
      %344 = vector.broadcast %343 : vector<1x128xf32> to vector<8x128xf32>
      %345 = arith.mulf %336, %344 : vector<8x128xf32>
      %346 = tpu.concatenate %345, %343 in 0 : vector<8x128xf32>, vector<1x128xf32> -> vector<9x128xf32>
      %347 = arith.truncf %346 : vector<9x128xf32> to vector<9x128xbf16>
      %cst_87 = arith.constant dense<0.000000e+00> : vector<9x128xf32>
      %348 = tpu.matmul %347, %4, %cst_87 {dimension_numbers = #tpu.dot_dimension_numbers<[1], [0], [0], [1], [0, 0, 1, 1], [], []>} : vector<9x128xbf16>, vector<128x128xbf16>, vector<9x128xf32> -> vector<9x128xf32>
      %349 = vector.extract_strided_slice %348 {offsets = [8, 0], sizes = [1, 128], strides = [1, 1]} : vector<9x128xf32> to vector<1x128xf32>
      %cst_88 = arith.constant 1.000000e-30 : f32
      %350 = vector.broadcast %cst_88 : f32 to vector<1x128xf32>
      %351 = arith.maximumf %349, %350 : vector<1x128xf32>
      %352 = vector.extract_strided_slice %348 {offsets = [0, 0], sizes = [8, 128], strides = [1, 1]} : vector<9x128xf32> to vector<8x128xf32>
      %353 = tpu.reciprocal %351 {approx = true} : vector<1x128xf32> -> vector<1x128xf32>
      %354 = vector.broadcast %353 : vector<1x128xf32> to vector<8x128xf32>
      %355 = arith.mulf %352, %354 : vector<8x128xf32>
      %356 = vector.extract_strided_slice %308 {offsets = [0, 0], sizes = [1, 128], strides = [1, 1]} : vector<8x128xf32> to vector<1x128xf32>
      %357 = arith.mulf %308, %308 : vector<8x128xf32>
      %cst_89 = arith.constant dense<0.000000e+00> : vector<128xf32>
      %358 = vector.multi_reduction <add>, %357, %cst_89 [0] : vector<8x128xf32> to vector<128xf32>
      %359 = vector.shape_cast %358 : vector<128xf32> to vector<1x128xf32>
      %cst_90 = arith.constant 2.000000e+00 : f32
      %360 = vector.broadcast %cst_90 : f32 to vector<1x128xf32>
      %361 = arith.mulf %360, %356 : vector<1x128xf32>
      %362 = arith.mulf %361, %356 : vector<1x128xf32>
      %363 = arith.subf %359, %362 : vector<1x128xf32>
      %cst_91 = arith.constant 1.000000e-07 : f32
      %364 = vector.broadcast %cst_91 : f32 to vector<1x128xf32>
      %365 = arith.maximumf %363, %364 : vector<1x128xf32>
      %366 = math.sqrt %365 : vector<1x128xf32>
      %cst_92 = arith.constant 1.000000e+06 : f32
      %367 = vector.broadcast %cst_92 : f32 to vector<1x128xf32>
      %368 = arith.minimumf %366, %367 : vector<1x128xf32>
      %369 = vector.broadcast %103 : f32 to vector<1x128xf32>
      %370 = arith.divf %368, %369 : vector<1x128xf32>
      %cst_93 = arith.constant 9.99999974E-6 : f32
      %371 = vector.broadcast %cst_93 : f32 to vector<1x128xf32>
      %372 = arith.maximumf %370, %371 : vector<1x128xf32>
      %373 = math.exp %372 : vector<1x128xf32>
      %cst_94 = arith.constant 1.000000e+00 : f32
      %374 = vector.broadcast %cst_94 : f32 to vector<1x128xf32>
      %375 = arith.divf %374, %373 : vector<1x128xf32>
      %376 = arith.addf %373, %375 : vector<1x128xf32>
      %cst_95 = arith.constant 5.000000e-01 : f32
      %377 = vector.broadcast %cst_95 : f32 to vector<1x128xf32>
      %378 = arith.mulf %377, %376 : vector<1x128xf32>
      %379 = arith.subf %373, %375 : vector<1x128xf32>
      %cst_96 = arith.constant 5.000000e-01 : f32
      %380 = vector.broadcast %cst_96 : f32 to vector<1x128xf32>
      %381 = arith.mulf %380, %379 : vector<1x128xf32>
      %382 = vector.broadcast %378 : vector<1x128xf32> to vector<8x128xf32>
      %383 = arith.mulf %382, %355 : vector<8x128xf32>
      %384 = tpu.reciprocal %372 {approx = true} : vector<1x128xf32> -> vector<1x128xf32>
      %385 = arith.mulf %381, %384 : vector<1x128xf32>
      %386 = vector.broadcast %385 : vector<1x128xf32> to vector<8x128xf32>
      %387 = arith.mulf %386, %308 : vector<8x128xf32>
      %388 = arith.addf %383, %387 : vector<8x128xf32>
      %cst_97 = arith.constant 0.000000e+00 : f32
      %389 = vector.broadcast %cst_97 : f32 to vector<8x128xf32>
      %390 = arith.select %2, %389, %388 : vector<8x128xi1>, vector<8x128xf32>
      %391 = arith.mulf %390, %390 : vector<8x128xf32>
      %cst_98 = arith.constant dense<0.000000e+00> : vector<128xf32>
      %392 = vector.multi_reduction <add>, %391, %cst_98 [0] : vector<8x128xf32> to vector<128xf32>
      %393 = vector.shape_cast %392 : vector<128xf32> to vector<1x128xf32>
      %394 = vector.broadcast %101 : f32 to vector<1x128xf32>
      %395 = arith.addf %394, %393 : vector<1x128xf32>
      %cst_99 = arith.constant 1.000000e-07 : f32
      %396 = vector.broadcast %cst_99 : f32 to vector<1x128xf32>
      %397 = arith.maximumf %395, %396 : vector<1x128xf32>
      %398 = math.sqrt %397 : vector<1x128xf32>
      %399 = vector.shape_cast %398 : vector<1x128xf32> to vector<1x128xf32>
      %400 = vector.broadcast %399 : vector<1x128xf32> to vector<8x128xf32>
      %401 = arith.select %2, %400, %388 : vector<8x128xi1>, vector<8x128xf32>
      %cst_100 = arith.constant 0.000000e+00 : f32
      %402 = vector.broadcast %cst_100 : f32 to vector<8x128xf32>
      %403 = arith.select %2, %402, %401 : vector<8x128xi1>, vector<8x128xf32>
      %404 = arith.mulf %403, %403 : vector<8x128xf32>
      %cst_101 = arith.constant dense<0.000000e+00> : vector<128xf32>
      %405 = vector.multi_reduction <add>, %404, %cst_101 [0] : vector<8x128xf32> to vector<128xf32>
      %406 = vector.shape_cast %405 : vector<128xf32> to vector<1x128xf32>
      %407 = vector.broadcast %101 : f32 to vector<1x128xf32>
      %408 = arith.addf %407, %406 : vector<1x128xf32>
      %cst_102 = arith.constant 1.000000e-07 : f32
      %409 = vector.broadcast %cst_102 : f32 to vector<1x128xf32>
      %410 = arith.maximumf %408, %409 : vector<1x128xf32>
      %411 = math.sqrt %410 : vector<1x128xf32>
      %412 = vector.shape_cast %411 : vector<1x128xf32> to vector<1x128xf32>
      %413 = vector.broadcast %412 : vector<1x128xf32> to vector<8x128xf32>
      %414 = arith.select %2, %413, %401 : vector<8x128xi1>, vector<8x128xf32>
      %cst_103 = arith.constant 0.000000e+00 : f32
      %415 = vector.broadcast %cst_103 : f32 to vector<8x128xf32>
      %416 = arith.select %2, %415, %414 : vector<8x128xi1>, vector<8x128xf32>
      %417 = arith.mulf %416, %416 : vector<8x128xf32>
      %cst_104 = arith.constant dense<0.000000e+00> : vector<128xf32>
      %418 = vector.multi_reduction <add>, %417, %cst_104 [0] : vector<8x128xf32> to vector<128xf32>
      %419 = vector.shape_cast %418 : vector<128xf32> to vector<1x128xf32>
      %cst_105 = arith.constant 1.000000e-10 : f32
      %420 = vector.broadcast %cst_105 : f32 to vector<1x128xf32>
      %421 = arith.maximumf %419, %420 : vector<1x128xf32>
      %422 = math.rsqrt %421 : vector<1x128xf32>
      %423 = vector.extract_strided_slice %414 {offsets = [0, 0], sizes = [1, 128], strides = [1, 1]} : vector<8x128xf32> to vector<1x128xf32>
      %424 = vector.broadcast %103 : f32 to vector<1x128xf32>
      %425 = arith.divf %423, %424 : vector<1x128xf32>
      %cst_106 = arith.constant 1.00000012 : f32
      %426 = vector.broadcast %cst_106 : f32 to vector<1x128xf32>
      %427 = arith.maximumf %425, %426 : vector<1x128xf32>
      %428 = arith.mulf %427, %427 : vector<1x128xf32>
      %cst_107 = arith.constant 1.000000e+00 : f32
      %429 = vector.broadcast %cst_107 : f32 to vector<1x128xf32>
      %430 = arith.subf %428, %429 : vector<1x128xf32>
      %431 = math.sqrt %430 : vector<1x128xf32>
      %432 = arith.addf %427, %431 : vector<1x128xf32>
      %433 = math.log %432 : vector<1x128xf32>
      %434 = vector.broadcast %103 : f32 to vector<1x128xf32>
      %435 = arith.mulf %434, %433 : vector<1x128xf32>
      %436 = vector.broadcast %422 : vector<1x128xf32> to vector<8x128xf32>
      %437 = arith.mulf %416, %436 : vector<8x128xf32>
      %438 = vector.broadcast %435 : vector<1x128xf32> to vector<8x128xf32>
      %439 = arith.mulf %438, %437 : vector<8x128xf32>
      %cst_108 = arith.constant 0.000000e+00 : f32
      %440 = vector.broadcast %cst_108 : f32 to vector<8x128xf32>
      %441 = arith.select %2, %440, %439 : vector<8x128xi1>, vector<8x128xf32>
      %cst_109 = arith.constant 0.000000e+00 : f32
      %442 = vector.broadcast %cst_109 : f32 to vector<8x128xf32>
      %443 = arith.maximumf %441, %442 : vector<8x128xf32>
      %cst_110 = arith.constant 0.000000e+00 : f32
      %444 = vector.broadcast %cst_110 : f32 to vector<8x128xf32>
      %445 = arith.select %2, %444, %443 : vector<8x128xi1>, vector<8x128xf32>
      %cst_111 = arith.constant 0.000000e+00 : f32
      %446 = vector.broadcast %cst_111 : f32 to vector<8x128xf32>
      %447 = arith.select %2, %446, %445 : vector<8x128xi1>, vector<8x128xf32>
      %448 = arith.mulf %447, %447 : vector<8x128xf32>
      %cst_112 = arith.constant dense<0.000000e+00> : vector<128xf32>
      %449 = vector.multi_reduction <add>, %448, %cst_112 [0] : vector<8x128xf32> to vector<128xf32>
      %450 = vector.shape_cast %449 : vector<128xf32> to vector<1x128xf32>
      %cst_113 = arith.constant 1.000000e-10 : f32
      %451 = vector.broadcast %cst_113 : f32 to vector<1x128xf32>
      %452 = arith.maximumf %450, %451 : vector<1x128xf32>
      %453 = math.rsqrt %452 : vector<1x128xf32>
      %454 = arith.mulf %452, %453 : vector<1x128xf32>
      %455 = vector.broadcast %109 : f32 to vector<1x128xf32>
      %456 = arith.divf %454, %455 : vector<1x128xf32>
      %457 = math.exp %456 : vector<1x128xf32>
      %cst_114 = arith.constant 1.000000e+00 : f32
      %458 = vector.broadcast %cst_114 : f32 to vector<1x128xf32>
      %459 = arith.divf %458, %457 : vector<1x128xf32>
      %460 = arith.addf %457, %459 : vector<1x128xf32>
      %cst_115 = arith.constant 5.000000e-01 : f32
      %461 = vector.broadcast %cst_115 : f32 to vector<1x128xf32>
      %462 = arith.mulf %461, %460 : vector<1x128xf32>
      %463 = arith.subf %457, %459 : vector<1x128xf32>
      %cst_116 = arith.constant 5.000000e-01 : f32
      %464 = vector.broadcast %cst_116 : f32 to vector<1x128xf32>
      %465 = arith.mulf %464, %463 : vector<1x128xf32>
      %466 = vector.broadcast %109 : f32 to vector<1x128xf32>
      %467 = arith.mulf %466, %462 : vector<1x128xf32>
      %468 = vector.broadcast %109 : f32 to vector<1x128xf32>
      %469 = arith.mulf %468, %465 : vector<1x128xf32>
      %470 = vector.broadcast %453 : vector<1x128xf32> to vector<8x128xf32>
      %471 = arith.mulf %447, %470 : vector<8x128xf32>
      %472 = vector.broadcast %469 : vector<1x128xf32> to vector<8x128xf32>
      %473 = arith.mulf %472, %471 : vector<8x128xf32>
      %474 = vector.shape_cast %467 : vector<1x128xf32> to vector<1x128xf32>
      %475 = vector.broadcast %474 : vector<1x128xf32> to vector<8x128xf32>
      %476 = arith.select %2, %475, %473 : vector<8x128xi1>, vector<8x128xf32>
      %cst_117 = arith.constant 0.000000e+00 : f32
      %477 = vector.broadcast %cst_117 : f32 to vector<8x128xf32>
      %478 = arith.select %2, %477, %476 : vector<8x128xi1>, vector<8x128xf32>
      %479 = arith.mulf %478, %478 : vector<8x128xf32>
      %cst_118 = arith.constant dense<0.000000e+00> : vector<128xf32>
      %480 = vector.multi_reduction <add>, %479, %cst_118 [0] : vector<8x128xf32> to vector<128xf32>
      %481 = vector.shape_cast %480 : vector<128xf32> to vector<1x128xf32>
      %482 = vector.broadcast %106 : f32 to vector<1x128xf32>
      %483 = arith.addf %482, %481 : vector<1x128xf32>
      %cst_119 = arith.constant 1.000000e-07 : f32
      %484 = vector.broadcast %cst_119 : f32 to vector<1x128xf32>
      %485 = arith.maximumf %483, %484 : vector<1x128xf32>
      %486 = math.sqrt %485 : vector<1x128xf32>
      %487 = vector.shape_cast %486 : vector<1x128xf32> to vector<1x128xf32>
      %488 = vector.broadcast %487 : vector<1x128xf32> to vector<8x128xf32>
      %489 = arith.select %2, %488, %476 : vector<8x128xi1>, vector<8x128xf32>
      %cst_120 = arith.constant 0.000000e+00 : f32
      %490 = vector.broadcast %cst_120 : f32 to vector<8x128xf32>
      %491 = arith.select %2, %490, %489 : vector<8x128xi1>, vector<8x128xf32>
      %492 = arith.mulf %491, %491 : vector<8x128xf32>
      %cst_121 = arith.constant dense<0.000000e+00> : vector<128xf32>
      %493 = vector.multi_reduction <add>, %492, %cst_121 [0] : vector<8x128xf32> to vector<128xf32>
      %494 = vector.shape_cast %493 : vector<128xf32> to vector<1x128xf32>
      %495 = vector.broadcast %106 : f32 to vector<1x128xf32>
      %496 = arith.addf %495, %494 : vector<1x128xf32>
      %cst_122 = arith.constant 1.000000e-07 : f32
      %497 = vector.broadcast %cst_122 : f32 to vector<1x128xf32>
      %498 = arith.maximumf %496, %497 : vector<1x128xf32>
      %499 = math.sqrt %498 : vector<1x128xf32>
      %500 = vector.shape_cast %499 : vector<1x128xf32> to vector<1x128xf32>
      %501 = vector.broadcast %500 : vector<1x128xf32> to vector<8x128xf32>
      %502 = arith.select %2, %501, %489 : vector<8x128xi1>, vector<8x128xf32>
      scf.yield %502 : vector<8x128xf32>
    }
    %c2_i32_18 = arith.constant 2 : i32
    %c2 = arith.constant 2 : index
    %69 = memref.load %arg1[%c2] : memref<3xf32, #tpu.memory_space<smem>>
    %cst_19 = arith.constant 0.000000e+00 : f32
    %70 = vector.broadcast %cst_19 : f32 to vector<8x128xf32>
    %71 = arith.select %2, %70, %68 : vector<8x128xi1>, vector<8x128xf32>
    %72 = arith.mulf %71, %71 : vector<8x128xf32>
    %cst_20 = arith.constant dense<0.000000e+00> : vector<128xf32>
    %73 = vector.multi_reduction <add>, %72, %cst_20 [0] : vector<8x128xf32> to vector<128xf32>
    %74 = vector.shape_cast %73 : vector<128xf32> to vector<1x128xf32>
    %cst_21 = arith.constant 1.000000e-10 : f32
    %75 = vector.broadcast %cst_21 : f32 to vector<1x128xf32>
    %76 = arith.maximumf %74, %75 : vector<1x128xf32>
    %77 = math.rsqrt %76 : vector<1x128xf32>
    %78 = vector.extract_strided_slice %68 {offsets = [0, 0], sizes = [1, 128], strides = [1, 1]} : vector<8x128xf32> to vector<1x128xf32>
    %79 = vector.broadcast %69 : f32 to vector<1x128xf32>
    %80 = arith.divf %78, %79 : vector<1x128xf32>
    %cst_22 = arith.constant 1.00000012 : f32
    %81 = vector.broadcast %cst_22 : f32 to vector<1x128xf32>
    %82 = arith.maximumf %80, %81 : vector<1x128xf32>
    %83 = arith.mulf %82, %82 : vector<1x128xf32>
    %cst_23 = arith.constant 1.000000e+00 : f32
    %84 = vector.broadcast %cst_23 : f32 to vector<1x128xf32>
    %85 = arith.subf %83, %84 : vector<1x128xf32>
    %86 = math.sqrt %85 : vector<1x128xf32>
    %87 = arith.addf %82, %86 : vector<1x128xf32>
    %88 = math.log %87 : vector<1x128xf32>
    %89 = vector.broadcast %69 : f32 to vector<1x128xf32>
    %90 = arith.mulf %89, %88 : vector<1x128xf32>
    %91 = vector.broadcast %77 : vector<1x128xf32> to vector<8x128xf32>
    %92 = arith.mulf %71, %91 : vector<8x128xf32>
    %93 = vector.broadcast %90 : vector<1x128xf32> to vector<8x128xf32>
    %94 = arith.mulf %93, %92 : vector<8x128xf32>
    %cst_24 = arith.constant 0.000000e+00 : f32
    %95 = vector.broadcast %cst_24 : f32 to vector<8x128xf32>
    %96 = arith.select %2, %95, %94 : vector<8x128xi1>, vector<8x128xf32>
    %cst_25 = arith.constant 0.000000e+00 : f32
    %97 = vector.broadcast %cst_25 : f32 to vector<8x128xf32>
    %98 = arith.select %2, %97, %96 : vector<8x128xi1>, vector<8x128xf32>
    %c0_26 = arith.constant 0 : index
    %c0_27 = arith.constant 0 : index
    %99 = vector.load %arg7[%c0_26, %c0_27] : memref<8x128xf32, #tpu.memory_space<vmem>>, vector<8x128xf32>
    tpu.vector_store %arg7[%c0_26, %c0_27], %98 {strides = array<i32>} : memref<8x128xf32, #tpu.memory_space<vmem>>, vector<8x128xf32>,
    return
  }
}

</mosaic_0001>

<llo_original>
// kernel: tpu_custom_call.1
$region0: #{tpu_custom_call.1}
  #allocation0 [shape = 'u32[]', space=smem, size = 0x4, offset = 0x4, fixed_abs, tag = 'smem constant byte address 0x4 - core index']
  #allocation1 [shape = 'u32[144,128]{1,0:T(1,128)}', space=vmem, size = 0x12000, scoped, tag = 'internal scratch']
  %s0 = inlined_call_operand.vmem [shape: f32[3], index: 0, kind: input, shape index: {}]
  %s1 = inlined_call_operand.vmem [shape: f32[3], index: 1, kind: input, shape index: {}]
  %s2 = inlined_call_operand.hbm [shape: f32[8,128], index: 2, kind: input, shape index: {}]
  %s3 = inlined_call_operand.vmem [shape: f32[2,8,8], index: 3, kind: input, shape index: {}]
  %s4 = inlined_call_operand.hbm [shape: f32[2,8,8], index: 4, kind: input, shape index: {}]
  %s5 = inlined_call_operand.vmem [shape: f32[2,8,1], index: 5, kind: input, shape index: {}]
  %s6 = inlined_call_operand.hbm [shape: s8[128,128], index: 6, kind: input, shape index: {}]
  %s7 = inlined_call_operand.hbm [shape: f32[8,128], index: 7, kind: output, shape index: {}]
  %s8 = sld [smem:[#allocation0]]
  $region65: #{tpu_custom_call.1} parent=0
    _
  %s10 = ssub.s32 1, %s8
  %s11 = scalar_select 0, %s10, %s8
  $region1: #{tpu_custom_call.1} parent=0
    #allocation2 [shape = 'u8[512]{0}', space=smem, size = 0x200, scoped, tag = 'input window, operand 0, single buffered']
    #allocation3 [shape = 's32[1]{0}', space=sflag, size = 0x4, scoped, tag = 'scoped memory for tpu_custom_call.1']
    #allocation4 [shape = 's32[1]{0}', space=sflag, size = 0x4, scoped, tag = 'scoped memory for tpu_custom_call.1']
    #allocation5 [shape = 's32[1]{0}', space=sflag, size = 0x4, scoped, tag = 'scoped memory for tpu_custom_call.1']
    #allocation6 [shape = 'u8[512]{0}', space=smem, size = 0x200, scoped, tag = 'input window, operand 1, single buffered']
    #allocation7 [shape = 's32[1]{0}', space=sflag, size = 0x4, scoped, tag = 'scoped memory for tpu_custom_call.1']
    #allocation8 [shape = 'u8[4096]{0}', space=vmem, size = 0x1000, scoped, tag = 'input window, operand 2, single buffered']
    #allocation9 [shape = 'u8[8192]{0}', space=vmem, size = 0x2000, scoped, tag = 'input window, operand 4, single buffered']
    #allocation10 [shape = 's32[1]{0}', space=sflag, size = 0x4, scoped, tag = 'scoped memory for tpu_custom_call.1']
    #allocation11 [shape = 'u8[16384]{0}', space=vmem, size = 0x4000, scoped, tag = 'input window, operand 6, single buffered']
    #allocation12 [shape = 'u8[4096]{0}', space=vmem, size = 0x1000, scoped, tag = 'output window, operand 0, single buffered']
    %12 = vsyncpa [#allocation5], 0
    %13 = vsyncpa [#allocation7], 0
    %14 = vsyncpa [#allocation3], 0
    %15 = vsyncpa [#allocation10], 0
    %16 = vsyncpa [#allocation4], 0
    // Predicated region
    $region2: #{tpu_custom_call.1} parent=1 // pred_check
      _
    $region3: #{tpu_custom_call.1} parent=1 // pred_check_branch
      %18 = sbr.rel (0) target = $region5
    $region4: #{tpu_custom_call.1} parent=1 // pred_region
      %s20 = ssub.s32 16, 16
      %21 = vsyncadd [#allocation5], %s20
      %s23 = sshll.u32 %s0, 4
      %s24 = int_to_ptr.vmem [resolvable:$true] %s23
      %26 = dma.vmem_to_smem %s24, 16, [#allocation2], [#allocation5]
    $region5: #{tpu_custom_call.1} parent=1 // pred_fallthru
      _
    // Predicated region
    $region6: #{tpu_custom_call.1} parent=1 // pred_check
      _
    $region7: #{tpu_custom_call.1} parent=1 // pred_check_branch
      %28 = sbr.rel (0) target = $region9
    $region8: #{tpu_custom_call.1} parent=1 // pred_region
      %s30 = ssub.s32 16, 16
      %31 = vsyncadd [#allocation7], %s30
      %s33 = sshll.u32 %s1, 4
      %s34 = int_to_ptr.vmem [resolvable:$true] %s33
      %36 = dma.vmem_to_smem %s34, 16, [#allocation6], [#allocation7]
    $region9: #{tpu_custom_call.1} parent=1 // pred_fallthru
      _
    // Predicated region
    $region10: #{tpu_custom_call.1} parent=1 // pred_check
      _
    $region11: #{tpu_custom_call.1} parent=1 // pred_check_branch
      %38 = sbr.rel (0) target = $region13
    $region12: #{tpu_custom_call.1} parent=1 // pred_region
      %s40 = ssub.s32 128, 128
      %41 = vsyncadd [#allocation3], %s40
      %s43 = sshll.u32 [#allocation8], 4
      %s44 = int_to_ptr.vmem [resolvable:$true] %s43
      %46 = dma.hbm_to_vmem [thread:$0]  %s2, 128, %s44, [#allocation3]
    $region13: #{tpu_custom_call.1} parent=1 // pred_fallthru
      _
    // Predicated region
    $region14: #{tpu_custom_call.1} parent=1 // pred_check
      _
    $region15: #{tpu_custom_call.1} parent=1 // pred_check_branch
      %48 = sbr.rel (0) target = $region17
    $region16: #{tpu_custom_call.1} parent=1 // pred_region
      _
    $region17: #{tpu_custom_call.1} parent=1 // pred_fallthru
      _
    // Predicated region
    $region18: #{tpu_custom_call.1} parent=1 // pred_check
      _
    $region19: #{tpu_custom_call.1} parent=1 // pred_check_branch
      %50 = sbr.rel (0) target = $region21
    $region20: #{tpu_custom_call.1} parent=1 // pred_region
      %s52 = ssub.s32 256, 256
      %53 = vsyncadd [#allocation10], %s52
      %s54 = sshll.u32 [#allocation9], 4
      %s55 = int_to_ptr.vmem [resolvable:$true] %s54
      %60 = dma.hbm_to_vmem [thread:$0]  %s4, 256, %s55, [#allocation10], 128, 128, 8
    $region21: #{tpu_custom_call.1} parent=1 // pred_fallthru
      _
    // Predicated region
    $region22: #{tpu_custom_call.1} parent=1 // pred_check
      _
    $region23: #{tpu_custom_call.1} parent=1 // pred_check_branch
      %62 = sbr.rel (0) target = $region25
    $region24: #{tpu_custom_call.1} parent=1 // pred_region
      _
    $region25: #{tpu_custom_call.1} parent=1 // pred_fallthru
      _
    // Predicated region
    $region26: #{tpu_custom_call.1} parent=1 // pred_check
      _
    $region27: #{tpu_custom_call.1} parent=1 // pred_check_branch
      %64 = sbr.rel (0) target = $region29
    $region28: #{tpu_custom_call.1} parent=1 // pred_region
      %s66 = ssub.s32 512, 512
      %67 = vsyncadd [#allocation10], %s66
      %s68 = sshll.u32 [#allocation11], 4
      %s69 = int_to_ptr.vmem [resolvable:$true] %s68
      %74 = dma.hbm_to_vmem [thread:$0]  %s6, 512, %s69, [#allocation10], 128, 128, 8
    $region29: #{tpu_custom_call.1} parent=1 // pred_fallthru
      _
    // Predicated region
    $region30: #{tpu_custom_call.1} parent=1 // pred_check
      _
    $region31: #{tpu_custom_call.1} parent=1 // pred_check_branch
      %76 = sbr.rel (0) target = $region33
    $region32: #{tpu_custom_call.1} parent=1 // pred_region
      %77 = dma.done [#allocation5], 16
    $region33: #{tpu_custom_call.1} parent=1 // pred_fallthru
      _
    // Predicated region
    $region34: #{tpu_custom_call.1} parent=1 // pred_check
      _
    $region35: #{tpu_custom_call.1} parent=1 // pred_check_branch
      %79 = sbr.rel (0) target = $region37
    $region36: #{tpu_custom_call.1} parent=1 // pred_region
      %80 = dma.done [#allocation7], 16
    $region37: #{tpu_custom_call.1} parent=1 // pred_fallthru
      _
    // Predicated region
    $region38: #{tpu_custom_call.1} parent=1 // pred_check
      _
    $region39: #{tpu_custom_call.1} parent=1 // pred_check_branch
      %82 = sbr.rel (0) target = $region41
    $region40: #{tpu_custom_call.1} parent=1 // pred_region
      %83 = dma.done [#allocation3], 128
    $region41: #{tpu_custom_call.1} parent=1 // pred_fallthru
      _
    // Predicated region
    $region42: #{tpu_custom_call.1} parent=1 // pred_check
      _
    $region43: #{tpu_custom_call.1} parent=1 // pred_check_branch
      %85 = sbr.rel (0) target = $region45
    $region44: #{tpu_custom_call.1} parent=1 // pred_region
      %86 = dma.done [#allocation10], 256
    $region45: #{tpu_custom_call.1} parent=1 // pred_fallthru
      _
    // Predicated region
    $region46: #{tpu_custom_call.1} parent=1 // pred_check
      _
    $region47: #{tpu_custom_call.1} parent=1 // pred_check_branch
      %88 = sbr.rel (0) target = $region49
    $region48: #{tpu_custom_call.1} parent=1 // pred_region
      %89 = dma.done [#allocation10], 512
    $region49: #{tpu_custom_call.1} parent=1 // pred_fallthru
      _
    %90 = sfence
    %v92 = vlaneseq
    %v93 = vshrl.u32 %v92, 7
    %vm94 = vcmp.eq.s32.totalorder %v93, 0
    %v95 = vld [vmem:[#allocation11] sm:$0xff]
    %v96 = vld [vmem:[#allocation11 + $0x8] sm:$0xff]
    %v97 = vld [vmem:[#allocation11 + $0x10] sm:$0xff]
    %v98 = vld [vmem:[#allocation11 + $0x18] sm:$0xff]
    %v99 = vunpack.c.l.s8.bf16 %v95
    %v100 = vunpack.c.h.s8.bf16 %v95
    %v101 = vunpack.c.l.s8.bf16 %v96
    %v102 = vunpack.c.h.s8.bf16 %v96
    %v103 = vunpack.c.l.s8.bf16 %v97
    %v104 = vunpack.c.h.s8.bf16 %v97
    %v105 = vunpack.c.l.s8.bf16 %v98
    %v106 = vunpack.c.h.s8.bf16 %v98
    %s107 = sld [smem:[#allocation2]]
    %s108 = sld [smem:[#allocation6]]
    %v109 = vld [vmem:[#allocation8] sm:$0xff]
    %v110 = vsel %vm94, 0.0, %v109
    %v111 = vmul.f32 %v110, %v110
    %v112 = vrot.slane %v111, 4
    %v113 = vadd.f32 %v111, %v112
    %v114 = vrot.slane %v113, 2
    %v115 = vadd.f32 %v113, %v114
    %v116 = vrot.slane %v115, 1
    %v117 = vadd.f32 %v115, %v116
    %v118 = vmax.f32 %v117, 1e-10
    %v119 = vrsqrt.pop %v118
    %v120 = vmul.f32 %v118, %v119
    %v121 = vstv %s108
    %v122 = vrcp.pop %v121
    %v123 = vmul.f32 %v120, %v122
    %v124 = vmul.f32 %v123, 1.442695
    %v125 = vpow.pop %v124
    %v126 = vrcp.pop %v125
    %v127 = vmul.f32 1.0, %v126
    %v128 = vsub.f32 %v125, %v127
    %v129 = vmul.f32 %v128, 0.5
    %v130 = vmul.f32 %v121, %v129
    %v131 = vmul.f32 %v110, %v119
    %v132 = vmul.f32 %v130, %v131
    %v133 = vsel %vm94, 0.0, %v132
    %v134 = vmul.f32 %v133, %v133
    %v135 = vrot.slane %v134, 4
    %v136 = vadd.f32 %v134, %v135
    %v137 = vrot.slane %v136, 2
    %v138 = vadd.f32 %v136, %v137
    %v139 = vrot.slane %v138, 1
    %v140 = vadd.f32 %v138, %v139
    %v141 = vstv %s107
    %v142 = vadd.f32 %v141, %v140
    %v143 = vmax.f32 %v142, 1e-07
    %v144 = vrsqrt.pop %v143
    %v145 = vmul.f32 %v143, %v144
    %vm146 = vcmp.eq.f32.partialorder %v143, inf
    %v147 = vsel %vm146, %v143, %v145
    %vm148 = vcmp.eq.f32.partialorder %v143, 0.0
    %v149 = vand.u32 %v143, 2147483648
    %v150 = vsel %vm148, %v149, %v147
    %v151 = vsel %vm94, %v150, %v132
    loop: start=0, step=1, limit=2
    $region50: #{tpu_custom_call.1} parent=1 // loop_pre_header
      _
    $region51: #{tpu_custom_call.1} parent=1 // loop_header
      %s153 = sphi 0, %s157
      %p154 = scmp.ge.s32.totalorder %s153, 2
      %v158 = vphi %v151, %v706
    $region52: #{tpu_custom_call.1} parent=1 // loop_header_branch
      %156 = sbr.rel (%p154) target = $region56
    $region53: #{tpu_custom_call.1} parent=1 // loop_body
      %s159 = sld [smem:[#allocation2 + %s153]]
      %s160 = sld [smem:[#allocation6 + %s153]]
      %s161 = sadd.s32 %s153, 1
      %s162 = sld [smem:[#allocation2 + %s161]]
      %s163 = sld [smem:[#allocation6 + %s161]]
      %s164 = smul.u32 %s153, 8
      %s165 = scalar_lea.vmem %s3, %s164
      %v166 = vld [vmem:[%s165] sm:$0xff]
      %s167 = scalar_lea.vmem [#allocation9], %s164
      %v168 = vld [vmem:[%s167] sm:$0xff]
      %s169 = scalar_lea.vmem %s5, %s164
      %v170 = vld [vmem:[%s169] sm:$0xff]
      %v171 = vsel %vm94, 0.0, %v158
      %v172 = vmul.f32 %v171, %v171
      %v173 = vrot.slane %v172, 4
      %v174 = vadd.f32 %v172, %v173
      %v175 = vrot.slane %v174, 2
      %v176 = vadd.f32 %v174, %v175
      %v177 = vrot.slane %v176, 1
      %v178 = vadd.f32 %v176, %v177
      %v179 = vmax.f32 %v178, 1e-10
      %v180 = vrsqrt.pop %v179
      %v181 = vstv %s160
      %v182 = vrcp.pop %v181
      %v183 = vmul.f32 %v158, %v182
      %v184 = vmax.f32 %v183, 1.0000001
      %v185 = vmul.f32 %v184, %v184
      %v186 = vsub.f32 %v185, 1.0
      %v187 = vrsqrt.pop %v186
      %v188 = vmul.f32 %v186, %v187
      %vm189 = vcmp.eq.f32.partialorder %v186, inf
      %v190 = vsel %vm189, %v186, %v188
      %vm191 = vcmp.eq.f32.partialorder %v186, 0.0
      %v192 = vand.u32 %v186, 2147483648
      %v193 = vsel %vm191, %v192, %v190
      %v194 = vadd.f32 %v184, %v193
      %v195 = vlog2.pop %v194
      %v196 = vmul.f32 %v195, 0.6931472
      %v197 = vmul.f32 %v181, %v196
      %v198 = vmul.f32 %v171, %v180
      %v199 = vlaneseq
      %v200 = vshrl.u32 %v199, 7
      %v201 = vsub.s32 0, %v200
      %v202 = vrot.slane %v197, %v201
      %v203 = vmul.f32 %v202, %v198
      %v204 = vsel %vm94, 0.0, %v203
      %vm205 = vcmask 64512
      %v207 = vsel %vm205, %v166, 0
      %209 = vmatprep.subr.mxu0 0.0
      %210 = vmatpush1.msra.mxu0 0.0
      %211 = vmatprep.subr.mxu0 0.0
      %212 = vmatpush1.msra.mxu0 0.0
      %213 = vmatprep.subr.mxu0 0.0
      %214 = vmatpush1.msra.mxu0 0.0
      %215 = vmatprep.subr.mxu0 0.0
      %216 = vmatpush1.msra.mxu0 0.0
      %217 = vmatprep.subr.mxu0 0.0
      %218 = vmatpush1.msra.mxu0 0.0
      %219 = vmatprep.subr.mxu0 0.0
      %220 = vmatpush1.msra.mxu0 0.0
      %221 = vmatprep.subr.mxu0 0.0
      %222 = vmatpush1.msra.mxu0 0.0
      %223 = vmatprep.subr.mxu0 0.0
      %224 = vmatpush1.msra.mxu0 0.0
      %225 = vmatprep.subr.mxu0 0.0
      %226 = vmatpush1.msra.mxu0 0.0
      %227 = vmatprep.subr.mxu0 0.0
      %228 = vmatpush1.msra.mxu0 0.0
      %229 = vmatprep.subr.mxu0 0.0
      %230 = vmatpush1.msra.mxu0 0.0
      %231 = vmatprep.subr.mxu0 0.0
      %232 = vmatpush1.msra.mxu0 0.0
      %233 = vmatprep.subr.mxu0 0.0
      %234 = vmatpush1.msra.mxu0 0.0
      %235 = vmatprep.subr.mxu0 0.0
      %236 = vmatpush1.msra.mxu0 0.0
      %237 = vmatprep.subr.mxu0 0.0
      %238 = vmatpush1.msra.mxu0 0.0
      %239 = vmatprep.subr.mxu0 0.0
      %240 = vmatpush1.msra.mxu0 %v204
      %241 = vmatprep.subr.mxu0 0.0
      %242 = vmatpush2.msra.mxu0 0.0
      %243 = vmatprep.subr.mxu0 0.0
      %244 = vmatpush2.msra.mxu0 0.0
      %245 = vmatprep.subr.mxu0 0.0
      %246 = vmatpush2.msra.mxu0 0.0
      %247 = vmatprep.subr.mxu0 0.0
      %248 = vmatpush2.msra.mxu0 0.0
      %249 = vmatprep.subr.mxu0 0.0
      %250 = vmatpush2.msra.mxu0 0.0
      %251 = vmatprep.subr.mxu0 0.0
      %252 = vmatpush2.msra.mxu0 0.0
      %253 = vmatprep.subr.mxu0 0.0
      %254 = vmatpush2.msra.mxu0 0.0
      %255 = vmatprep.subr.mxu0 0.0
      %256 = vmatpush2.msra.mxu0 0.0
      %257 = vmatprep.subr.mxu0 0.0
      %258 = vmatpush2.msra.mxu0 0.0
      %259 = vmatprep.subr.mxu0 0.0
      %260 = vmatpush2.msra.mxu0 0.0
      %261 = vmatprep.subr.mxu0 0.0
      %262 = vmatpush2.msra.mxu0 0.0
      %263 = vmatprep.subr.mxu0 0.0
      %264 = vmatpush2.msra.mxu0 0.0
      %265 = vmatprep.subr.mxu0 0.0
      %266 = vmatpush2.msra.mxu0 0.0
      %267 = vmatprep.subr.mxu0 0.0
      %268 = vmatpush2.msra.mxu0 0.0
      %269 = vmatprep.subr.mxu0 0.0
      %270 = vmatpush2.msra.mxu0 0.0
      %271 = vmatprep.subr.mxu0 0.0
      %272 = vmatpush2.msra.mxu0 0.0
      %273 = vmatprep.mubr.f32.mxu0 0.0
      %274 = vmatmul.mubr.f32.gmra.mxu0 %v207
      %v275 = vpop.f32.mrf.mxu0
      %v276 = vadd.f32 0.0, %v275
      %v277 = vpop.f32.mrf.mxu0
      %278 = vdwg.mxu0
      %v279 = vsel %vm94, 0.0, %v276
      %v280 = vmul.f32 %v279, %v279
      %v281 = vrot.slane %v280, 4
      %v282 = vadd.f32 %v280, %v281
      %v283 = vrot.slane %v282, 2
      %v284 = vadd.f32 %v282, %v283
      %v285 = vrot.slane %v284, 1
      %v286 = vadd.f32 %v284, %v285
      %v287 = vmax.f32 %v286, 1e-10
      %v288 = vrsqrt.pop %v287
      %v289 = vmul.f32 %v287, %v288
      %v290 = vmul.f32 %v289, %v182
      %v291 = vmul.f32 %v290, 1.442695
      %v292 = vpow.pop %v291
      %v293 = vrcp.pop %v292
      %v294 = vmul.f32 1.0, %v293
      %v295 = vsub.f32 %v292, %v294
      %v296 = vmul.f32 %v295, 0.5
      %v297 = vmul.f32 %v181, %v296
      %v298 = vmul.f32 %v279, %v288
      %v299 = vmul.f32 %v297, %v298
      %v300 = vsel %vm94, 0.0, %v299
      %v301 = vmul.f32 %v300, %v300
      %v302 = vrot.slane %v301, 4
      %v303 = vadd.f32 %v301, %v302
      %v304 = vrot.slane %v303, 2
      %v305 = vadd.f32 %v303, %v304
      %v306 = vrot.slane %v305, 1
      %v307 = vadd.f32 %v305, %v306
      %v308 = vstv %s159
      %v309 = vadd.f32 %v308, %v307
      %v310 = vmax.f32 %v309, 1e-07
      %v311 = vrsqrt.pop %v310
      %v312 = vmul.f32 %v310, %v311
      %vm313 = vcmp.eq.f32.partialorder %v310, inf
      %v314 = vsel %vm313, %v310, %v312
      %vm315 = vcmp.eq.f32.partialorder %v310, 0.0
      %v316 = vand.u32 %v310, 2147483648
      %v317 = vsel %vm315, %v316, %v314
      %v318 = vsel %vm94, %v317, %v299
      %v319 = vmax.f32 %v307, 1e-10
      %v320 = vrsqrt.pop %v319
      %v321 = vmul.f32 %v319, %v320
      %v322 = vmul.f32 %v300, %v320
      %v323 = vsub.f32 0.0, %v321
      %v324 = vsub.f32 %v181, %v318
      %v325 = vlaneseq
      %v326 = vshrl.u32 %v325, 7
      %v327 = vsub.s32 0, %v326
      %v328 = vrot.slane %v324, %v327
      %v329 = vmul.f32 %v328, %v322
      %v330 = vsel %vm94, %v323, %v329
      %332 = vset.pattern.permute.xlu0 0
      %333 = vperm.xlu0 %332, %v170
      %v334 = vpop.permute.xlu0 %333
      %v336 = vmul.f32 %v322, %v334
      %v337 = vrot.slane %v336, 4
      %v338 = vadd.f32 %v336, %v337
      %v339 = vrot.slane %v338, 2
      %v340 = vadd.f32 %v338, %v339
      %v341 = vrot.slane %v340, 1
      %v342 = vadd.f32 %v340, %v341
      %v343 = vmul.f32 %v342, %v182
      %v344 = vmul.f32 %v343, %v330
      %v345 = vsub.f32 %v334, %v344
      %v346 = vsel %vm94, 0.0, %v345
      %v347 = vmul.f32 %v300, %v346
      %v348 = vrot.slane %v347, 4
      %v349 = vadd.f32 %v347, %v348
      %v350 = vrot.slane %v349, 2
      %v351 = vadd.f32 %v349, %v350
      %v352 = vrot.slane %v351, 1
      %v353 = vadd.f32 %v351, %v352
      %v354 = vmax.f32 %v318, 1e-07
      %v355 = vrcp.pop %v354
      %v356 = vmul.f32 %v353, %v355
      %v357 = vlaneseq
      %v358 = vshrl.u32 %v357, 7
      %v359 = vsub.s32 0, %v358
      %v360 = vrot.slane %v356, %v359
      %v361 = vsel %vm94, %v360, %v345
      %v362 = vmul.f32 %v361, %v361
      %v363 = vrot.slane %v362, 4
      %v364 = vadd.f32 %v362, %v363
      %v365 = vrot.slane %v364, 2
      %v366 = vadd.f32 %v364, %v365
      %v367 = vrot.slane %v366, 1
      %v368 = vadd.f32 %v366, %v367
      %v369 = vmul.f32 %v361, 2.0
      %v370 = vmul.f32 %v369, %v361
      %v371 = vsub.f32 %v368, %v370
      %v372 = vmax.f32 %v371, 1e-07
      %v373 = vrsqrt.pop %v372
      %v374 = vmul.f32 %v372, %v373
      %vm375 = vcmp.eq.f32.partialorder %v372, inf
      %v376 = vsel %vm375, %v372, %v374
      %vm377 = vcmp.eq.f32.partialorder %v372, 0.0
      %v378 = vand.u32 %v372, 2147483648
      %v379 = vsel %vm377, %v378, %v376
      %v380 = vmin.f32 %v379, 1000000.0
      %v381 = vmul.f32 %v380, %v182
      %v382 = vmax.f32 %v381, 1e-05
      %v383 = vmul.f32 %v382, 1.442695
      %v384 = vpow.pop %v383
      %v385 = vrcp.pop %v384
      %v386 = vmul.f32 1.0, %v385
      %v387 = vadd.f32 %v384, %v386
      %v388 = vmul.f32 %v387, 0.5
      %v389 = vsub.f32 %v384, %v386
      %v390 = vmul.f32 %v389, 0.5
      %v391 = vlaneseq
      %v392 = vshrl.u32 %v391, 7
      %v393 = vsub.s32 0, %v392
      %v394 = vrot.slane %v388, %v393
      %v395 = vmul.f32 %v394, %v318
      %v396 = vrcp.pop %v382
      %v397 = vmul.f32 %v390, %v396
      %v398 = vlaneseq
      %v399 = vshrl.u32 %v398, 7
      %v400 = vsub.s32 0, %v399
      %v401 = vrot.slane %v397, %v400
      %v402 = vmul.f32 %v401, %v361
      %v403 = vadd.f32 %v395, %v402
      %v404 = vsel %vm94, 0.0, %v403
      %v405 = vmul.f32 %v404, %v404
      %v406 = vrot.slane %v405, 4
      %v407 = vadd.f32 %v405, %v406
      %v408 = vrot.slane %v407, 2
      %v409 = vadd.f32 %v407, %v408
      %v410 = vrot.slane %v409, 1
      %v411 = vadd.f32 %v409, %v410
      %v412 = vadd.f32 %v308, %v411
      %v413 = vmax.f32 %v412, 1e-07
      %v414 = vrsqrt.pop %v413
      %v415 = vmul.f32 %v413, %v414
      %vm416 = vcmp.eq.f32.partialorder %v413, inf
      %v417 = vsel %vm416, %v413, %v415
      %vm418 = vcmp.eq.f32.partialorder %v413, 0.0
      %v419 = vand.u32 %v413, 2147483648
      %v420 = vsel %vm418, %v419, %v417
      %v421 = vsel %vm94, %v420, %v403
      %v422 = vmax.f32 %v411, 1e-10
      %v423 = vrsqrt.pop %v422
      %v424 = vmul.f32 %v421, %v182
      %v425 = vmax.f32 %v424, 1.0000001
      %v426 = vmul.f32 %v425, %v425
      %v427 = vsub.f32 %v426, 1.0
      %v428 = vrsqrt.pop %v427
      %v429 = vmul.f32 %v427, %v428
      %vm430 = vcmp.eq.f32.partialorder %v427, inf
      %v431 = vsel %vm430, %v427, %v429
      %vm432 = vcmp.eq.f32.partialorder %v427, 0.0
      %v433 = vand.u32 %v427, 2147483648
      %v434 = vsel %vm432, %v433, %v431
      %v435 = vadd.f32 %v425, %v434
      %v436 = vlog2.pop %v435
      %v437 = vmul.f32 %v436, 0.6931472
      %v438 = vmul.f32 %v181, %v437
      %v439 = vmul.f32 %v404, %v423
      %v440 = vlaneseq
      %v441 = vshrl.u32 %v440, 7
      %v442 = vsub.s32 0, %v441
      %v443 = vrot.slane %v438, %v442
      %v444 = vmul.f32 %v443, %v439
      %v445 = vsel %vm94, 0.0, %v444
      %v447 = vsel %vm205, %v168, 0
      %449 = vmatprep.subr.mxu0 0.0
      %450 = vmatpush1.msra.mxu0 0.0
      %451 = vmatprep.subr.mxu0 0.0
      %452 = vmatpush1.msra.mxu0 0.0
      %453 = vmatprep.subr.mxu0 0.0
      %454 = vmatpush1.msra.mxu0 0.0
      %455 = vmatprep.subr.mxu0 0.0
      %456 = vmatpush1.msra.mxu0 0.0
      %457 = vmatprep.subr.mxu0 0.0
      %458 = vmatpush1.msra.mxu0 0.0
      %459 = vmatprep.subr.mxu0 0.0
      %460 = vmatpush1.msra.mxu0 0.0
      %461 = vmatprep.subr.mxu0 0.0
      %462 = vmatpush1.msra.mxu0 0.0
      %463 = vmatprep.subr.mxu0 0.0
      %464 = vmatpush1.msra.mxu0 0.0
      %465 = vmatprep.subr.mxu0 0.0
      %466 = vmatpush1.msra.mxu0 0.0
      %467 = vmatprep.subr.mxu0 0.0
      %468 = vmatpush1.msra.mxu0 0.0
      %469 = vmatprep.subr.mxu0 0.0
      %470 = vmatpush1.msra.mxu0 0.0
      %471 = vmatprep.subr.mxu0 0.0
      %472 = vmatpush1.msra.mxu0 0.0
      %473 = vmatprep.subr.mxu0 0.0
      %474 = vmatpush1.msra.mxu0 0.0
      %475 = vmatprep.subr.mxu0 0.0
      %476 = vmatpush1.msra.mxu0 0.0
      %477 = vmatprep.subr.mxu0 0.0
      %478 = vmatpush1.msra.mxu0 0.0
      %479 = vmatprep.subr.mxu0 0.0
      %480 = vmatpush1.msra.mxu0 %v445
      %481 = vmatprep.subr.mxu0 0.0
      %482 = vmatpush2.msra.mxu0 0.0
      %483 = vmatprep.subr.mxu0 0.0
      %484 = vmatpush2.msra.mxu0 0.0
      %485 = vmatprep.subr.mxu0 0.0
      %486 = vmatpush2.msra.mxu0 0.0
      %487 = vmatprep.subr.mxu0 0.0
      %488 = vmatpush2.msra.mxu0 0.0
      %489 = vmatprep.subr.mxu0 0.0
      %490 = vmatpush2.msra.mxu0 0.0
      %491 = vmatprep.subr.mxu0 0.0
      %492 = vmatpush2.msra.mxu0 0.0
      %493 = vmatprep.subr.mxu0 0.0
      %494 = vmatpush2.msra.mxu0 0.0
      %495 = vmatprep.subr.mxu0 0.0
      %496 = vmatpush2.msra.mxu0 0.0
      %497 = vmatprep.subr.mxu0 0.0
      %498 = vmatpush2.msra.mxu0 0.0
      %499 = vmatprep.subr.mxu0 0.0
      %500 = vmatpush2.msra.mxu0 0.0
      %501 = vmatprep.subr.mxu0 0.0
      %502 = vmatpush2.msra.mxu0 0.0
      %503 = vmatprep.subr.mxu0 0.0
      %504 = vmatpush2.msra.mxu0 0.0
      %505 = vmatprep.subr.mxu0 0.0
      %506 = vmatpush2.msra.mxu0 0.0
      %507 = vmatprep.subr.mxu0 0.0
      %508 = vmatpush2.msra.mxu0 0.0
      %509 = vmatprep.subr.mxu0 0.0
      %510 = vmatpush2.msra.mxu0 0.0
      %511 = vmatprep.subr.mxu0 0.0
      %512 = vmatpush2.msra.mxu0 0.0
      %513 = vmatprep.mubr.f32.mxu0 0.0
      %514 = vmatmul.mubr.f32.gmra.mxu0 %v447
      %v515 = vpop.f32.mrf.mxu0
      %v516 = vadd.f32 0.0, %v515
      %v517 = vpop.f32.mrf.mxu0
      %518 = vdwg.mxu0
      %v519 = vrot.slane %v516, 4
      %v520 = vadd.f32 %v516, %v519
      %v521 = vrot.slane %v520, 2
      %v522 = vadd.f32 %v520, %v521
      %v523 = vrot.slane %v522, 1
      %v524 = vadd.f32 %v522, %v523
      %525 = vmax.xlane.f32.xlu0 %v524
      %v526 = vpop.xlane.xlu0 %525
      %v527 = vsub.f32 %v524, %v526
      %v528 = vmul.f32 %v527, 1.442695
      %v529 = vpow.pop %v528
      %v530 = vmul.f32 %v516, %v529
      %v531 = vpack.c.bf16 %v529, %v530
      %532 = vmatprep.subr.bf16.mxu0 0
      %533 = vmatpush1.bf16.msra.mxu0 %v106
      %534 = vmatprep.subr.bf16.mxu0 0
      %535 = vmatpush1.bf16.msra.mxu0 %v105
      %536 = vmatprep.subr.bf16.mxu0 0
      %537 = vmatpush1.bf16.msra.mxu0 %v104
      %538 = vmatprep.subr.bf16.mxu0 0
      %539 = vmatpush1.bf16.msra.mxu0 %v103
      %540 = vmatprep.subr.bf16.mxu0 0
      %541 = vmatpush1.bf16.msra.mxu0 %v102
      %542 = vmatprep.subr.bf16.mxu0 0
      %543 = vmatpush1.bf16.msra.mxu0 %v101
      %544 = vmatprep.subr.bf16.mxu0 0
      %545 = vmatpush1.bf16.msra.mxu0 %v100
      %546 = vmatprep.subr.bf16.mxu0 0
      %547 = vmatpush1.bf16.msra.mxu0 %v99
      %548 = vmatprep.subr.bf16.mxu0 0
      %549 = vmatpush2.bf16.msra.mxu0 0
      %550 = vmatprep.subr.bf16.mxu0 0
      %551 = vmatpush2.bf16.msra.mxu0 0
      %552 = vmatprep.subr.bf16.mxu0 0
      %553 = vmatpush2.bf16.msra.mxu0 0
      %554 = vmatprep.subr.bf16.mxu0 0
      %555 = vmatpush2.bf16.msra.mxu0 0
      %556 = vmatprep.subr.bf16.mxu0 0
      %557 = vmatpush2.bf16.msra.mxu0 0
      %558 = vmatprep.subr.bf16.mxu0 0
      %559 = vmatpush2.bf16.msra.mxu0 0
      %560 = vmatprep.subr.bf16.mxu0 0
      %561 = vmatpush2.bf16.msra.mxu0 0
      %562 = vmatprep.subr.bf16.mxu0 0
      %563 = vmatpush2.bf16.msra.mxu0 0
      %564 = vmatprep.mubr.bf16.mxu0 0
      %565 = vmatmul.mubr.bf16.gmra.mxu0 %v531
      %v566 = vpop.f32.mrf.mxu0
      %v567 = vadd.f32 0.0, %v566
      %v568 = vpop.f32.mrf.mxu0
      %v569 = vpop.f32.mrf.mxu0
      %v570 = vadd.f32 0.0, %v569
      %v571 = vpop.f32.mrf.mxu0
      %572 = vdwg.mxu0
      %v573 = vmax.f32 %v570, 1e-30
      %v574 = vrcp.pop %v573
      %v575 = vlaneseq
      %v576 = vshrl.u32 %v575, 7
      %v577 = vsub.s32 0, %v576
      %v578 = vrot.slane %v574, %v577
      %v579 = vmul.f32 %v567, %v578
      %v580 = vmul.f32 %v421, %v421
      %v581 = vrot.slane %v580, 4
      %v582 = vadd.f32 %v580, %v581
      %v583 = vrot.slane %v582, 2
      %v584 = vadd.f32 %v582, %v583
      %v585 = vrot.slane %v584, 1
      %v586 = vadd.f32 %v584, %v585
      %v587 = vmul.f32 %v421, 2.0
      %v588 = vmul.f32 %v587, %v421
      %v589 = vsub.f32 %v586, %v588
      %v590 = vmax.f32 %v589, 1e-07
      %v591 = vrsqrt.pop %v590
      %v592 = vmul.f32 %v590, %v591
      %vm593 = vcmp.eq.f32.partialorder %v590, inf
      %v594 = vsel %vm593, %v590, %v592
      %vm595 = vcmp.eq.f32.partialorder %v590, 0.0
      %v596 = vand.u32 %v590, 2147483648
      %v597 = vsel %vm595, %v596, %v594
      %v598 = vmin.f32 %v597, 1000000.0
      %v599 = vmul.f32 %v598, %v182
      %v600 = vmax.f32 %v599, 1e-05
      %v601 = vmul.f32 %v600, 1.442695
      %v602 = vpow.pop %v601
      %v603 = vrcp.pop %v602
      %v604 = vmul.f32 1.0, %v603
      %v605 = vadd.f32 %v602, %v604
      %v606 = vmul.f32 %v605, 0.5
      %v607 = vsub.f32 %v602, %v604
      %v608 = vmul.f32 %v607, 0.5
      %v609 = vlaneseq
      %v610 = vshrl.u32 %v609, 7
      %v611 = vsub.s32 0, %v610
      %v612 = vrot.slane %v606, %v611
      %v613 = vmul.f32 %v612, %v579
      %v614 = vrcp.pop %v600
      %v615 = vmul.f32 %v608, %v614
      %v616 = vlaneseq
      %v617 = vshrl.u32 %v616, 7
      %v618 = vsub.s32 0, %v617
      %v619 = vrot.slane %v615, %v618
      %v620 = vmul.f32 %v619, %v421
      %v621 = vadd.f32 %v613, %v620
      %v622 = vsel %vm94, 0.0, %v621
      %v623 = vmul.f32 %v622, %v622
      %v624 = vrot.slane %v623, 4
      %v625 = vadd.f32 %v623, %v624
      %v626 = vrot.slane %v625, 2
      %v627 = vadd.f32 %v625, %v626
      %v628 = vrot.slane %v627, 1
      %v629 = vadd.f32 %v627, %v628
      %v630 = vadd.f32 %v308, %v629
      %v631 = vmax.f32 %v630, 1e-07
      %v632 = vrsqrt.pop %v631
      %v633 = vmul.f32 %v631, %v632
      %vm634 = vcmp.eq.f32.partialorder %v631, inf
      %v635 = vsel %vm634, %v631, %v633
      %vm636 = vcmp.eq.f32.partialorder %v631, 0.0
      %v637 = vand.u32 %v631, 2147483648
      %v638 = vsel %vm636, %v637, %v635
      %v639 = vsel %vm94, %v638, %v621
      %v640 = vmax.f32 %v629, 1e-10
      %v641 = vrsqrt.pop %v640
      %v642 = vmul.f32 %v639, %v182
      %v643 = vmax.f32 %v642, 1.0000001
      %v644 = vmul.f32 %v643, %v643
      %v645 = vsub.f32 %v644, 1.0
      %v646 = vrsqrt.pop %v645
      %v647 = vmul.f32 %v645, %v646
      %vm648 = vcmp.eq.f32.partialorder %v645, inf
      %v649 = vsel %vm648, %v645, %v647
      %vm650 = vcmp.eq.f32.partialorder %v645, 0.0
      %v651 = vand.u32 %v645, 2147483648
      %v652 = vsel %vm650, %v651, %v649
      %v653 = vadd.f32 %v643, %v652
      %v654 = vlog2.pop %v653
      %v655 = vmul.f32 %v654, 0.6931472
      %v656 = vmul.f32 %v181, %v655
      %v657 = vmul.f32 %v622, %v641
      %v658 = vlaneseq
      %v659 = vshrl.u32 %v658, 7
      %v660 = vsub.s32 0, %v659
      %v661 = vrot.slane %v656, %v660
      %v662 = vmul.f32 %v661, %v657
      %v663 = vsel %vm94, 0.0, %v662
      %v664 = vmax.f32 %v663, 0.0
      %v665 = vsel %vm94, 0.0, %v664
      %v666 = vmul.f32 %v665, %v665
      %v667 = vrot.slane %v666, 4
      %v668 = vadd.f32 %v666, %v667
      %v669 = vrot.slane %v668, 2
      %v670 = vadd.f32 %v668, %v669
      %v671 = vrot.slane %v670, 1
      %v672 = vadd.f32 %v670, %v671
      %v673 = vmax.f32 %v672, 1e-10
      %v674 = vrsqrt.pop %v673
      %v675 = vmul.f32 %v673, %v674
      %v676 = vstv %s163
      %v677 = vrcp.pop %v676
      %v678 = vmul.f32 %v675, %v677
      %v679 = vmul.f32 %v678, 1.442695
      %v680 = vpow.pop %v679
      %v681 = vrcp.pop %v680
      %v682 = vmul.f32 1.0, %v681
      %v683 = vsub.f32 %v680, %v682
      %v684 = vmul.f32 %v683, 0.5
      %v685 = vmul.f32 %v676, %v684
      %v686 = vmul.f32 %v665, %v674
      %v687 = vmul.f32 %v685, %v686
      %v688 = vsel %vm94, 0.0, %v687
      %v689 = vmul.f32 %v688, %v688
      %v690 = vrot.slane %v689, 4
      %v691 = vadd.f32 %v689, %v690
      %v692 = vrot.slane %v691, 2
      %v693 = vadd.f32 %v691, %v692
      %v694 = vrot.slane %v693, 1
      %v695 = vadd.f32 %v693, %v694
      %v696 = vstv %s162
      %v697 = vadd.f32 %v696, %v695
      %v698 = vmax.f32 %v697, 1e-07
      %v699 = vrsqrt.pop %v698
      %v700 = vmul.f32 %v698, %v699
      %vm701 = vcmp.eq.f32.partialorder %v698, inf
      %v702 = vsel %vm701, %v698, %v700
      %vm703 = vcmp.eq.f32.partialorder %v698, 0.0
      %v704 = vand.u32 %v698, 2147483648
      %v705 = vsel %vm703, %v704, %v702
      %v706 = vsel %vm94, %v705, %v687
    $region54: #{tpu_custom_call.1} parent=1 // loop_footer
      %s157 = sadd.s32 1, %s153
    $region55: #{tpu_custom_call.1} parent=1 // loop_footer_branch
      %152 = sbr.rel target = $region51
    $region56: #{tpu_custom_call.1} parent=1 // loop_exit
      _
    %s707 = sld [smem:[#allocation6 + $0x2]]
    %v708 = vsel %vm94, 0.0, %v158
    %v709 = vmul.f32 %v708, %v708
    %v710 = vrot.slane %v709, 4
    %v711 = vadd.f32 %v709, %v710
    %v712 = vrot.slane %v711, 2
    %v713 = vadd.f32 %v711, %v712
    %v714 = vrot.slane %v713, 1
    %v715 = vadd.f32 %v713, %v714
    %v716 = vmax.f32 %v715, 1e-10
    %v717 = vrsqrt.pop %v716
    %v718 = vstv %s707
    %v719 = vrcp.pop %v718
    %v720 = vmul.f32 %v158, %v719
    %v721 = vmax.f32 %v720, 1.0000001
    %v722 = vmul.f32 %v721, %v721
    %v723 = vsub.f32 %v722, 1.0
    %v724 = vrsqrt.pop %v723
    %v725 = vmul.f32 %v723, %v724
    %vm726 = vcmp.eq.f32.partialorder %v723, inf
    %v727 = vsel %vm726, %v723, %v725
    %vm728 = vcmp.eq.f32.partialorder %v723, 0.0
    %v729 = vand.u32 %v723, 2147483648
    %v730 = vsel %vm728, %v729, %v727
    %v731 = vadd.f32 %v721, %v730
    %v732 = vlog2.pop %v731
    %v733 = vmul.f32 %v732, 0.6931472
    %v734 = vmul.f32 %v718, %v733
    %v735 = vmul.f32 %v708, %v717
    %v736 = vlaneseq
    %v737 = vshrl.u32 %v736, 7
    %v738 = vsub.s32 0, %v737
    %v739 = vrot.slane %v734, %v738
    %v740 = vmul.f32 %v739, %v735
    %v741 = vsel %vm94, 0.0, %v740
    %742 = vst [vmem:[#allocation12] sm:$0xff] %v741
    // Predicated region
    $region57: #{tpu_custom_call.1} parent=1 // pred_check
      _
    $region58: #{tpu_custom_call.1} parent=1 // pred_check_branch
      %744 = sbr.rel (0) target = $region60
    $region59: #{tpu_custom_call.1} parent=1 // pred_region
      %s746 = ssub.s32 128, 128
      %747 = vsyncadd [#allocation4], %s746
      %s749 = sshll.u32 [#allocation12], 4
      %s750 = int_to_ptr.vmem [resolvable:$true] %s749
      %752 = dma.vmem_to_hbm [thread:$0]  %s750, 128, %s7, [#allocation4]
    $region60: #{tpu_custom_call.1} parent=1 // pred_fallthru
      _
    // Predicated region
    $region61: #{tpu_custom_call.1} parent=1 // pred_check
      _
    $region62: #{tpu_custom_call.1} parent=1 // pred_check_branch
      %754 = sbr.rel (0) target = $region64
    $region63: #{tpu_custom_call.1} parent=1 // pred_region
      %755 = dma.done [#allocation4], 128
    $region64: #{tpu_custom_call.1} parent=1 // pred_fallthru
      _
    %756 = vsyncpa [#allocation3], 1
    %757 = vsyncpa [#allocation10], 1
    %758 = vsyncpa [#allocation4], 1
    %759 = vsyncpa [#allocation5], 1
    %760 = vsyncpa [#allocation7], 1

</llo_original>
